<compile_context>
chip_gen: v5e
topology: v5e:2x2
jax: 0.10.0
libtpu: 0.0.40
codegen_flags: <defaults>
</compile_context>

<pallas_src>
import functools

import jax
import jax.numpy as jnp
from jax.experimental import pallas as pl
from jax.experimental.pallas import tpu as pltpu


def _round_up(v, m):
    return ((v + m - 1) // m) * m


def _spinal_kernel(H, L,
                   x_ref, wa_ref, ba_ref, wb_ref, bb_ref,
                   wprev_ref, wout_ref, bout_ref,
                   o_ref, hbuf_ref):
    """One row-tile of the fused spinal FFN.

    x_ref    : (TILE_N, idim)     full-width activation tile
    wa_ref   : (H, 4L)            packed base weights for layers 1,3,5,7
    ba_ref   : (1, 4L)            packed biases        for layers 1,3,5,7
    wb_ref   : (H, 4L)            packed base weights for layers 2,4,6,8
    bb_ref   : (1, 4L)            packed biases        for layers 2,4,6,8
    wprev_ref: (7, L, L)          prev-activation weights, layers 2..8
    wout_ref : (8L, idim)         output projection (w_2.weight.T)
    bout_ref : (1, idim)
    o_ref    : (TILE_N, idim)
    hbuf_ref : (TILE_N, 8L)       VMEM scratch holding cat(x1..x8)
    """
    f32 = jnp.float32
    op_dt = wprev_ref.dtype          # keep all MXU operands in the model dtype

    # Cast once so the dots are not mixed-precision; split halves in-register
    # (lane-aligned, zero-cost selection when H % 128 == 0).
    x = x_ref[...].astype(op_dt)
    xa = x[:, :H]
    xb = x[:, H:2 * H]

    # Two lane-dense base matmuls cover the "base" input of all 8 layers.
    base_a = (jnp.dot(xa, wa_ref[...], preferred_element_type=f32)
              + ba_ref[...].astype(f32))                       # (TILE_N, 4L)
    base_b = (jnp.dot(xb, wb_ref[...], preferred_element_type=f32)
              + bb_ref[...].astype(f32))                       # (TILE_N, 4L)

    # Layer 1.
    h = jnp.maximum(base_a[:, 0:L], 0.0)                       # (TILE_N, L), f32
    hbuf_ref[:, 0:L] = h.astype(hbuf_ref.dtype)

    # Layers 2..8: serial prev chain; each activation lands in its lane slot.
    for k in range(7):
        if k % 2 == 0:                 # layers 2, 4, 6, 8 -> base = xb
            base_blk, slot = base_b, k // 2
        else:                          # layers 3, 5, 7    -> base = xa
            base_blk, slot = base_a, (k + 1) // 2
        pre = (base_blk[:, slot * L:(slot + 1) * L]
               + jnp.dot(h.astype(op_dt), wprev_ref[k],
                         preferred_element_type=f32))
        h = jnp.maximum(pre, 0.0)
        hbuf_ref[:, (k + 1) * L:(k + 2) * L] = h.astype(hbuf_ref.dtype)

    # Single fused output projection: K = 8L instead of 8 separate K = L dots.
    out = (jnp.dot(hbuf_ref[...].astype(op_dt), wout_ref[...],
                   preferred_element_type=f32)
           + bout_ref[...].astype(f32))
    o_ref[...] = out.astype(o_ref.dtype)


def _vmem_limit_bytes(TILE_N, H, L, idim, x_bytes, w_bytes, single_buffer_weights):
    """Explicit VMEM budget (double-buffered x/out tiles + resident weights +
    activation scratch), floored at 32 MiB and capped at 64 MiB so it is valid
    on v7x (v5e/v6e have 128 MiB and can be raised further if needed)."""
    wbuf = 1 if single_buffer_weights else 2
    act_io = 2 * 2 * TILE_N * idim * x_bytes                       # x + out, 2x buffered
    weights = (2 * (H * 4 * L + 4 * L) + 7 * L * L
               + 8 * L * idim + idim) * w_bytes * wbuf
    scratch = TILE_N * 8 * L * max(w_bytes, 4)
    est = (act_io + weights + scratch) * 3 // 2                    # 1.5x headroom
    return int(min(max(est, 32 * 1024 * 1024), 64 * 1024 * 1024))


def _build_call(N, idim, H, L, TILE_N, x_dtype, w_dtype, single_buffer_weights):
    grid = (pl.cdiv(N, TILE_N),)      # partial last block handled by Pallas
    # Lane-aligned slot writes only when L % 128 == 0; otherwise keep the
    # scratch f32 so sub-lane slot stores stay plain 32-bit masked stores.
    hbuf_dtype = w_dtype if (L % 128 == 0) else jnp.float32

    def row_spec(width):
        return pl.BlockSpec((TILE_N, width), lambda i: (i, 0))

    def const_spec(shape):
        ndim = len(shape)
        index_map = lambda i: (0,) * ndim
        if single_buffer_weights:
            # Resident weights: a single buffer is enough (index never changes).
            return pl.BlockSpec(shape, index_map, pipeline_mode=pl.Buffered(1))
        return pl.BlockSpec(shape, index_map)

    kernel = functools.partial(_spinal_kernel, H, L)
    vmem_limit = _vmem_limit_bytes(TILE_N, H, L, idim,
                                   jnp.dtype(x_dtype).itemsize,
                                   jnp.dtype(w_dtype).itemsize,
                                   single_buffer_weights)

    return pl.pallas_call(
        kernel,
        out_shape=jax.ShapeDtypeStruct((N, idim), x_dtype),
        grid=grid,
        in_specs=[
            row_spec(idim),              # x (full width, split in-kernel)
            const_spec((H, 4 * L)),      # wa_pack
            const_spec((1, 4 * L)),      # ba_pack
            const_spec((H, 4 * L)),      # wb_pack
            const_spec((1, 4 * L)),      # bb_pack
            const_spec((7, L, L)),       # wprev
            const_spec((8 * L, idim)),   # wout_t
            const_spec((1, idim)),       # bout
        ],
        out_specs=pl.BlockSpec((TILE_N, idim), lambda i: (i, 0)),
        scratch_shapes=[pltpu.VMEM((TILE_N, 8 * L), hbuf_dtype)],
        compiler_params=pltpu.CompilerParams(
            dimension_semantics=("parallel",),
            vmem_limit_bytes=vmem_limit),
    )


def spinal_feed_forward8(x, params):
    """x: (B, T, idim) -> (B, T, idim)."""
    B, T, idim = x.shape
    H = params["half_width"]
    L = params["layer_width"]
    N = B * T

    x2d = x.reshape(N, idim)          # free leading-dim collapse, no HBM copy

    # Row tile: 1024 rows (multiple of 16 for bf16 sublane packing), capped to
    # the problem size for small inputs.  No host padding — cdiv grid + masked
    # last-block writeback handle N % TILE_N != 0.
    TILE_N = min(1024, _round_up(N, 16))

    w_dtype = params["wprev"].dtype
    args = (x2d,
            params["wa_pack"], params["ba_pack"],
            params["wb_pack"], params["bb_pack"],
            params["wprev"], params["wout_t"], params["bout"])

    try:
        call = _build_call(N, idim, H, L, TILE_N, x.dtype, w_dtype,
                           single_buffer_weights=True)
        out2d = jax.block_until_ready(call(*args))
    except Exception:
        # Older jax without BlockSpec(pipeline_mode=pl.Buffered(1)) support:
        # fall back to default (double-buffered) resident weights.
        call = _build_call(N, idim, H, L, TILE_N, x.dtype, w_dtype,
                           single_buffer_weights=False)
        out2d = jax.block_until_ready(call(*args))

    return out2d.reshape(B, T, idim)


def init_params(key, idim, hidden_units):
    """Deterministic synthetic parameters matching the nn.Linear shapes,
    pre-packed for the kernel (all transposed to (in, out))."""
    H = idim // 2
    L = hidden_units // 8
    keys = jax.random.split(key, 20)

    def lin(kw, kb, fan_in, fan_out):
        bound = 1.0 / jnp.sqrt(fan_in)
        w = jax.random.uniform(kw, (fan_out, fan_in), jnp.float32, -bound, bound)
        b = jax.random.uniform(kb, (fan_out,), jnp.float32, -bound, bound)
        return w, b

    w1, b1 = lin(keys[0], keys[1], H, L)                       # Linear(H, L)
    wsp, bsp = [], []
    for i in range(7):                                         # Linear(H+L, L) x7
        w, b = lin(keys[2 + 2 * i], keys[3 + 2 * i], H + L, L)
        wsp.append(w)
        bsp.append(b)
    wout, bout = lin(keys[16], keys[17], hidden_units, idim)   # Linear(hidden, idim)

    #   layers using xa: 1, 3, 5, 7  -> wsp indices       1, 3, 5 (plus w1)
    #   layers using xb: 2, 4, 6, 8  -> wsp indices 0, 2, 4, 6
    # NOTE: for best performance L and idim should be multiples of 128 so the
    # slot slices / scratch writes / output store are lane-tile aligned.
    wa_pack = jnp.concatenate(
        [w1.T] + [wsp[i][:, :H].T for i in (1, 3, 5)], axis=1)          # (H, 4L)
    ba_pack = jnp.concatenate(
        [b1] + [bsp[i] for i in (1, 3, 5)]).reshape(1, 4 * L)           # (1, 4L)
    wb_pack = jnp.concatenate(
        [wsp[i][:, :H].T for i in (0, 2, 4, 6)], axis=1)                # (H, 4L)
    bb_pack = jnp.concatenate(
        [bsp[i] for i in (0, 2, 4, 6)]).reshape(1, 4 * L)               # (1, 4L)
    wprev = jnp.stack([wsp[i][:, H:].T for i in range(7)])              # (7, L, L)
    wout_t = wout.T                                                     # (8L, idim)

    return {
        "half_width": H,
        "layer_width": L,
        "wa_pack": wa_pack,
        "ba_pack": ba_pack,
        "wb_pack": wb_pack,
        "bb_pack": bb_pack,
        "wprev": wprev,
        "wout_t": wout_t,
        "bout": bout.reshape(1, idim),
        # raw weights kept for the pure-JAX reference check
        "_w1": w1, "_b1": b1, "_wsp": wsp, "_bsp": bsp,
        "_wout": wout, "_bout": bout,
    }


def reference(x, params):
    """Pure-JAX reference of the PyTorch forward (eval mode)."""
    H = params["half_width"]
    xa = x[:, :, :H]
    xb = x[:, :, H:2 * H]
    relu = lambda v: jnp.maximum(v, 0.0)
    lin = lambda v, w, b: jnp.einsum("bto,io->bti", v, w) + b

    h = relu(lin(xa, params["_w1"], params["_b1"]))
    outs = [h]
    prev = h
    for i in range(7):
        base = xb if (i % 2 == 0) else xa
        inp = jnp.concatenate([base, prev], axis=-1)
        h = relu(lin(inp, params["_wsp"][i], params["_bsp"][i]))
        outs.append(h)
        prev = h
    hidden = relu(jnp.concatenate(outs, axis=-1))
    return lin(hidden, params["_wout"], params["_bout"])


if __name__ == "__main__":
    B, T = 2, 8
    idim, hidden_units = 16, 32      # H = 8, L = 4 (toy shapes for correctness)
    key = jax.random.PRNGKey(0)
    kx, kp = jax.random.split(key)

    x = jax.random.normal(kx, (B, T, idim), jnp.float32)
    params = init_params(kp, idim, hidden_units)

    # f32 path: must match the reference exactly (within f32 tolerance).
    y = jax.block_until_ready(spinal_feed_forward8(x, params))
    y_ref = reference(x, params)
    assert y.shape == (B, T, idim)
    assert jnp.allclose(y, y_ref, atol=1e-5, rtol=1e-5), "f32 mismatch vs reference"

    # bf16 operands / f32 accumulation path (review item: run the MXU in bf16).
    params_bf16 = dict(params)
    for name in ("wa_pack", "ba_pack", "wb_pack", "bb_pack",
                 "wprev", "wout_t", "bout"):
        params_bf16[name] = params[name].astype(jnp.bfloat16)
    y_bf16 = jax.block_until_ready(
        spinal_feed_forward8(x.astype(jnp.bfloat16), params_bf16))
    assert y_bf16.shape == (B, T, idim)
    assert float(jnp.max(jnp.abs(y_bf16.astype(jnp.float32) - y_ref))) < 0.25, \
        "bf16 path deviates too far from f32 reference"

    print("KERNEL_OK")
</pallas_src>

<mosaic_0001>
module attributes {stable_mosaic.version = 11 : i64} {
  func.func @_spinal_kernel(%arg0: i32, %arg1: memref<16x16xf32, #tpu.memory_space<vmem>>, %arg2: memref<8x16xf32, #tpu.memory_space<vmem>>, %arg3: memref<1x16xf32, #tpu.memory_space<vmem>>, %arg4: memref<8x16xf32, #tpu.memory_space<vmem>>, %arg5: memref<1x16xf32, #tpu.memory_space<vmem>>, %arg6: memref<7x4x4xf32, #tpu.memory_space<vmem>>, %arg7: memref<32x16xf32, #tpu.memory_space<vmem>>, %arg8: memref<1x16xf32, #tpu.memory_space<vmem>>, %arg9: memref<16x16xf32, #tpu.memory_space<vmem>>, %arg10: memref<16x32xf32, #tpu.memory_space<vmem>>) attributes {dimension_semantics = [#tpu.dimension_semantics<parallel>], iteration_bounds = array<i64: 1>, scalar_prefetch = 0 : i64, scratch_operands = 1 : i64, tpu.core_type = #tpu.core_type<tc>, window_params = [{transform_indices = @transform_0, window_bounds = array<i64: 16, 16>}, {pipeline_mode = #tpu.pipeline_mode<synchronous>, transform_indices = @transform_1, window_bounds = array<i64: 8, 16>}, {pipeline_mode = #tpu.pipeline_mode<synchronous>, transform_indices = @transform_2, window_bounds = array<i64: 1, 16>}, {pipeline_mode = #tpu.pipeline_mode<synchronous>, transform_indices = @transform_3, window_bounds = array<i64: 8, 16>}, {pipeline_mode = #tpu.pipeline_mode<synchronous>, transform_indices = @transform_4, window_bounds = array<i64: 1, 16>}, {pipeline_mode = #tpu.pipeline_mode<synchronous>, transform_indices = @transform_5, window_bounds = array<i64: 7, 4, 4>}, {pipeline_mode = #tpu.pipeline_mode<synchronous>, transform_indices = @transform_6, window_bounds = array<i64: 32, 16>}, {pipeline_mode = #tpu.pipeline_mode<synchronous>, transform_indices = @transform_7, window_bounds = array<i64: 1, 16>}, {transform_indices = @transform_8, window_bounds = array<i64: 16, 16>}]} {
    %c0 = arith.constant 0 : index
    %c0_0 = arith.constant 0 : index
    %0 = vector.load %arg1[%c0, %c0_0] : memref<16x16xf32, #tpu.memory_space<vmem>>, vector<16x16xf32>
    %1 = vector.extract_strided_slice %0 {offsets = [0, 0], sizes = [16, 8], strides = [1, 1]} : vector<16x16xf32> to vector<16x8xf32>
    %2 = vector.extract_strided_slice %0 {offsets = [0, 8], sizes = [16, 8], strides = [1, 1]} : vector<16x16xf32> to vector<16x8xf32>
    %c0_1 = arith.constant 0 : index
    %c0_2 = arith.constant 0 : index
    %3 = vector.load %arg2[%c0_1, %c0_2] : memref<8x16xf32, #tpu.memory_space<vmem>>, vector<8x16xf32>
    %cst = arith.constant dense<0.000000e+00> : vector<16x16xf32>
    %4 = tpu.matmul %1, %3, %cst {dimension_numbers = #tpu.dot_dimension_numbers<[1], [0], [0], [1], [0, 0, 1, 1], [], []>} : vector<16x8xf32>, vector<8x16xf32>, vector<16x16xf32> -> vector<16x16xf32>
    %c0_3 = arith.constant 0 : index
    %c0_4 = arith.constant 0 : index
    %5 = vector.load %arg3[%c0_3, %c0_4] : memref<1x16xf32, #tpu.memory_space<vmem>>, vector<1x16xf32>
    %6 = vector.broadcast %5 : vector<1x16xf32> to vector<16x16xf32>
    %7 = arith.addf %4, %6 : vector<16x16xf32>
    %c0_5 = arith.constant 0 : index
    %c0_6 = arith.constant 0 : index
    %8 = vector.load %arg4[%c0_5, %c0_6] : memref<8x16xf32, #tpu.memory_space<vmem>>, vector<8x16xf32>
    %cst_7 = arith.constant dense<0.000000e+00> : vector<16x16xf32>
    %9 = tpu.matmul %2, %8, %cst_7 {dimension_numbers = #tpu.dot_dimension_numbers<[1], [0], [0], [1], [0, 0, 1, 1], [], []>} : vector<16x8xf32>, vector<8x16xf32>, vector<16x16xf32> -> vector<16x16xf32>
    %c0_8 = arith.constant 0 : index
    %c0_9 = arith.constant 0 : index
    %10 = vector.load %arg5[%c0_8, %c0_9] : memref<1x16xf32, #tpu.memory_space<vmem>>, vector<1x16xf32>
    %11 = vector.broadcast %10 : vector<1x16xf32> to vector<16x16xf32>
    %12 = arith.addf %9, %11 : vector<16x16xf32>
    %13 = vector.extract_strided_slice %7 {offsets = [0, 0], sizes = [16, 4], strides = [1, 1]} : vector<16x16xf32> to vector<16x4xf32>
    %cst_10 = arith.constant 0.000000e+00 : f32
    %14 = vector.broadcast %cst_10 : f32 to vector<16x4xf32>
    %15 = arith.maximumf %13, %14 : vector<16x4xf32>
    %c0_11 = arith.constant 0 : index
    %c0_12 = arith.constant 0 : index
    %16 = vector.load %arg10[%c0_11, %c0_12] : memref<16x32xf32, #tpu.memory_space<vmem>>, vector<16x4xf32>
    tpu.vector_store %arg10[%c0_11, %c0_12], %15 {strides = array<i32>} : memref<16x32xf32, #tpu.memory_space<vmem>>, vector<16x4xf32>,
    %17 = vector.extract_strided_slice %12 {offsets = [0, 0], sizes = [16, 4], strides = [1, 1]} : vector<16x16xf32> to vector<16x4xf32>
    %c0_13 = arith.constant 0 : index
    %c0_14 = arith.constant 0 : index
    %c0_15 = arith.constant 0 : index
    %18 = vector.load %arg6[%c0_13, %c0_14, %c0_15] : memref<7x4x4xf32, #tpu.memory_space<vmem>>, vector<1x4x4xf32>
    %19 = vector.shape_cast %18 : vector<1x4x4xf32> to vector<4x4xf32>
    %cst_16 = arith.constant dense<0.000000e+00> : vector<16x4xf32>
    %20 = tpu.matmul %15, %19, %cst_16 {dimension_numbers = #tpu.dot_dimension_numbers<[1], [0], [0], [1], [0, 0, 1, 1], [], []>} : vector<16x4xf32>, vector<4x4xf32>, vector<16x4xf32> -> vector<16x4xf32>
    %21 = arith.addf %17, %20 : vector<16x4xf32>
    %cst_17 = arith.constant 0.000000e+00 : f32
    %22 = vector.broadcast %cst_17 : f32 to vector<16x4xf32>
    %23 = arith.maximumf %21, %22 : vector<16x4xf32>
    %c0_18 = arith.constant 0 : index
    %c4 = arith.constant 4 : index
    %24 = vector.load %arg10[%c0_18, %c4] : memref<16x32xf32, #tpu.memory_space<vmem>>, vector<16x4xf32>
    tpu.vector_store %arg10[%c0_18, %c4], %23 {strides = array<i32>} : memref<16x32xf32, #tpu.memory_space<vmem>>, vector<16x4xf32>,
    %25 = vector.extract_strided_slice %7 {offsets = [0, 4], sizes = [16, 4], strides = [1, 1]} : vector<16x16xf32> to vector<16x4xf32>
    %c1 = arith.constant 1 : index
    %c0_19 = arith.constant 0 : index
    %c0_20 = arith.constant 0 : index
    %26 = vector.load %arg6[%c1, %c0_19, %c0_20] : memref<7x4x4xf32, #tpu.memory_space<vmem>>, vector<1x4x4xf32>
    %27 = vector.shape_cast %26 : vector<1x4x4xf32> to vector<4x4xf32>
    %cst_21 = arith.constant dense<0.000000e+00> : vector<16x4xf32>
    %28 = tpu.matmul %23, %27, %cst_21 {dimension_numbers = #tpu.dot_dimension_numbers<[1], [0], [0], [1], [0, 0, 1, 1], [], []>} : vector<16x4xf32>, vector<4x4xf32>, vector<16x4xf32> -> vector<16x4xf32>
    %29 = arith.addf %25, %28 : vector<16x4xf32>
    %cst_22 = arith.constant 0.000000e+00 : f32
    %30 = vector.broadcast %cst_22 : f32 to vector<16x4xf32>
    %31 = arith.maximumf %29, %30 : vector<16x4xf32>
    %c0_23 = arith.constant 0 : index
    %c8 = arith.constant 8 : index
    %32 = vector.load %arg10[%c0_23, %c8] : memref<16x32xf32, #tpu.memory_space<vmem>>, vector<16x4xf32>
    tpu.vector_store %arg10[%c0_23, %c8], %31 {strides = array<i32>} : memref<16x32xf32, #tpu.memory_space<vmem>>, vector<16x4xf32>,
    %33 = vector.extract_strided_slice %12 {offsets = [0, 4], sizes = [16, 4], strides = [1, 1]} : vector<16x16xf32> to vector<16x4xf32>
    %c2 = arith.constant 2 : index
    %c0_24 = arith.constant 0 : index
    %c0_25 = arith.constant 0 : index
    %34 = vector.load %arg6[%c2, %c0_24, %c0_25] : memref<7x4x4xf32, #tpu.memory_space<vmem>>, vector<1x4x4xf32>
    %35 = vector.shape_cast %34 : vector<1x4x4xf32> to vector<4x4xf32>
    %cst_26 = arith.constant dense<0.000000e+00> : vector<16x4xf32>
    %36 = tpu.matmul %31, %35, %cst_26 {dimension_numbers = #tpu.dot_dimension_numbers<[1], [0], [0], [1], [0, 0, 1, 1], [], []>} : vector<16x4xf32>, vector<4x4xf32>, vector<16x4xf32> -> vector<16x4xf32>
    %37 = arith.addf %33, %36 : vector<16x4xf32>
    %cst_27 = arith.constant 0.000000e+00 : f32
    %38 = vector.broadcast %cst_27 : f32 to vector<16x4xf32>
    %39 = arith.maximumf %37, %38 : vector<16x4xf32>
    %c0_28 = arith.constant 0 : index
    %c12 = arith.constant 12 : index
    %40 = vector.load %arg10[%c0_28, %c12] : memref<16x32xf32, #tpu.memory_space<vmem>>, vector<16x4xf32>
    tpu.vector_store %arg10[%c0_28, %c12], %39 {strides = array<i32>} : memref<16x32xf32, #tpu.memory_space<vmem>>, vector<16x4xf32>,
    %41 = vector.extract_strided_slice %7 {offsets = [0, 8], sizes = [16, 4], strides = [1, 1]} : vector<16x16xf32> to vector<16x4xf32>
    %c3 = arith.constant 3 : index
    %c0_29 = arith.constant 0 : index
    %c0_30 = arith.constant 0 : index
    %42 = vector.load %arg6[%c3, %c0_29, %c0_30] : memref<7x4x4xf32, #tpu.memory_space<vmem>>, vector<1x4x4xf32>
    %43 = vector.shape_cast %42 : vector<1x4x4xf32> to vector<4x4xf32>
    %cst_31 = arith.constant dense<0.000000e+00> : vector<16x4xf32>
    %44 = tpu.matmul %39, %43, %cst_31 {dimension_numbers = #tpu.dot_dimension_numbers<[1], [0], [0], [1], [0, 0, 1, 1], [], []>} : vector<16x4xf32>, vector<4x4xf32>, vector<16x4xf32> -> vector<16x4xf32>
    %45 = arith.addf %41, %44 : vector<16x4xf32>
    %cst_32 = arith.constant 0.000000e+00 : f32
    %46 = vector.broadcast %cst_32 : f32 to vector<16x4xf32>
    %47 = arith.maximumf %45, %46 : vector<16x4xf32>
    %c0_33 = arith.constant 0 : index
    %c16 = arith.constant 16 : index
    %48 = vector.load %arg10[%c0_33, %c16] : memref<16x32xf32, #tpu.memory_space<vmem>>, vector<16x4xf32>
    tpu.vector_store %arg10[%c0_33, %c16], %47 {strides = array<i32>} : memref<16x32xf32, #tpu.memory_space<vmem>>, vector<16x4xf32>,
    %49 = vector.extract_strided_slice %12 {offsets = [0, 8], sizes = [16, 4], strides = [1, 1]} : vector<16x16xf32> to vector<16x4xf32>
    %c4_34 = arith.constant 4 : index
    %c0_35 = arith.constant 0 : index
    %c0_36 = arith.constant 0 : index
    %50 = vector.load %arg6[%c4_34, %c0_35, %c0_36] : memref<7x4x4xf32, #tpu.memory_space<vmem>>, vector<1x4x4xf32>
    %51 = vector.shape_cast %50 : vector<1x4x4xf32> to vector<4x4xf32>
    %cst_37 = arith.constant dense<0.000000e+00> : vector<16x4xf32>
    %52 = tpu.matmul %47, %51, %cst_37 {dimension_numbers = #tpu.dot_dimension_numbers<[1], [0], [0], [1], [0, 0, 1, 1], [], []>} : vector<16x4xf32>, vector<4x4xf32>, vector<16x4xf32> -> vector<16x4xf32>
    %53 = arith.addf %49, %52 : vector<16x4xf32>
    %cst_38 = arith.constant 0.000000e+00 : f32
    %54 = vector.broadcast %cst_38 : f32 to vector<16x4xf32>
    %55 = arith.maximumf %53, %54 : vector<16x4xf32>
    %c0_39 = arith.constant 0 : index
    %c20 = arith.constant 20 : index
    %56 = vector.load %arg10[%c0_39, %c20] : memref<16x32xf32, #tpu.memory_space<vmem>>, vector<16x4xf32>
    tpu.vector_store %arg10[%c0_39, %c20], %55 {strides = array<i32>} : memref<16x32xf32, #tpu.memory_space<vmem>>, vector<16x4xf32>,
    %57 = vector.extract_strided_slice %7 {offsets = [0, 12], sizes = [16, 4], strides = [1, 1]} : vector<16x16xf32> to vector<16x4xf32>
    %c5 = arith.constant 5 : index
    %c0_40 = arith.constant 0 : index
    %c0_41 = arith.constant 0 : index
    %58 = vector.load %arg6[%c5, %c0_40, %c0_41] : memref<7x4x4xf32, #tpu.memory_space<vmem>>, vector<1x4x4xf32>
    %59 = vector.shape_cast %58 : vector<1x4x4xf32> to vector<4x4xf32>
    %cst_42 = arith.constant dense<0.000000e+00> : vector<16x4xf32>
    %60 = tpu.matmul %55, %59, %cst_42 {dimension_numbers = #tpu.dot_dimension_numbers<[1], [0], [0], [1], [0, 0, 1, 1], [], []>} : vector<16x4xf32>, vector<4x4xf32>, vector<16x4xf32> -> vector<16x4xf32>
    %61 = arith.addf %57, %60 : vector<16x4xf32>
    %cst_43 = arith.constant 0.000000e+00 : f32
    %62 = vector.broadcast %cst_43 : f32 to vector<16x4xf32>
    %63 = arith.maximumf %61, %62 : vector<16x4xf32>
    %c0_44 = arith.constant 0 : index
    %c24 = arith.constant 24 : index
    %64 = vector.load %arg10[%c0_44, %c24] : memref<16x32xf32, #tpu.memory_space<vmem>>, vector<16x4xf32>
    tpu.vector_store %arg10[%c0_44, %c24], %63 {strides = array<i32>} : memref<16x32xf32, #tpu.memory_space<vmem>>, vector<16x4xf32>,
    %65 = vector.extract_strided_slice %12 {offsets = [0, 12], sizes = [16, 4], strides = [1, 1]} : vector<16x16xf32> to vector<16x4xf32>
    %c6 = arith.constant 6 : index
    %c0_45 = arith.constant 0 : index
    %c0_46 = arith.constant 0 : index
    %66 = vector.load %arg6[%c6, %c0_45, %c0_46] : memref<7x4x4xf32, #tpu.memory_space<vmem>>, vector<1x4x4xf32>
    %67 = vector.shape_cast %66 : vector<1x4x4xf32> to vector<4x4xf32>
    %cst_47 = arith.constant dense<0.000000e+00> : vector<16x4xf32>
    %68 = tpu.matmul %63, %67, %cst_47 {dimension_numbers = #tpu.dot_dimension_numbers<[1], [0], [0], [1], [0, 0, 1, 1], [], []>} : vector<16x4xf32>, vector<4x4xf32>, vector<16x4xf32> -> vector<16x4xf32>
    %69 = arith.addf %65, %68 : vector<16x4xf32>
    %cst_48 = arith.constant 0.000000e+00 : f32
    %70 = vector.broadcast %cst_48 : f32 to vector<16x4xf32>
    %71 = arith.maximumf %69, %70 : vector<16x4xf32>
    %c0_49 = arith.constant 0 : index
    %c28 = arith.constant 28 : index
    %72 = vector.load %arg10[%c0_49, %c28] : memref<16x32xf32, #tpu.memory_space<vmem>>, vector<16x4xf32>
    tpu.vector_store %arg10[%c0_49, %c28], %71 {strides = array<i32>} : memref<16x32xf32, #tpu.memory_space<vmem>>, vector<16x4xf32>,
    %c0_50 = arith.constant 0 : index
    %c0_51 = arith.constant 0 : index
    %73 = vector.load %arg10[%c0_50, %c0_51] : memref<16x32xf32, #tpu.memory_space<vmem>>, vector<16x32xf32>
    %c0_52 = arith.constant 0 : index
    %c0_53 = arith.constant 0 : index
    %74 = vector.load %arg7[%c0_52, %c0_53] : memref<32x16xf32, #tpu.memory_space<vmem>>, vector<32x16xf32>
    %cst_54 = arith.constant dense<0.000000e+00> : vector<16x16xf32>
    %75 = tpu.matmul %73, %74, %cst_54 {dimension_numbers = #tpu.dot_dimension_numbers<[1], [0], [0], [1], [0, 0, 1, 1], [], []>} : vector<16x32xf32>, vector<32x16xf32>, vector<16x16xf32> -> vector<16x16xf32>
    %c0_55 = arith.constant 0 : index
    %c0_56 = arith.constant 0 : index
    %76 = vector.load %arg8[%c0_55, %c0_56] : memref<1x16xf32, #tpu.memory_space<vmem>>, vector<1x16xf32>
    %77 = vector.broadcast %76 : vector<1x16xf32> to vector<16x16xf32>
    %78 = arith.addf %75, %77 : vector<16x16xf32>
    %c0_57 = arith.constant 0 : index
    %c0_58 = arith.constant 0 : index
    %79 = vector.load %arg9[%c0_57, %c0_58] : memref<16x16xf32, #tpu.memory_space<vmem>>, vector<16x16xf32>
    tpu.vector_store %arg9[%c0_57, %c0_58], %78 {strides = array<i32>} : memref<16x16xf32, #tpu.memory_space<vmem>>, vector<16x16xf32>,
    return
  }
  func.func @transform_0(%arg0: i32) -> (i32, i32) {
    %c0_i32 = arith.constant 0 : i32
    %c0_i32_0 = arith.constant 0 : i32
    return %arg0, %c0_i32 : i32, i32
  }
  func.func @transform_1(%arg0: i32) -> (i32, i32) {
    %c0_i32 = arith.constant 0 : i32
    %c0_i32_0 = arith.constant 0 : i32
    %c0_i32_1 = arith.constant 0 : i32
    return %c0_i32, %c0_i32_0 : i32, i32
  }
  func.func @transform_2(%arg0: i32) -> (i32, i32) {
    %c0_i32 = arith.constant 0 : i32
    %c0_i32_0 = arith.constant 0 : i32
    %c0_i32_1 = arith.constant 0 : i32
    return %c0_i32, %c0_i32_0 : i32, i32
  }
  func.func @transform_3(%arg0: i32) -> (i32, i32) {
    %c0_i32 = arith.constant 0 : i32
    %c0_i32_0 = arith.constant 0 : i32
    %c0_i32_1 = arith.constant 0 : i32
    return %c0_i32, %c0_i32_0 : i32, i32
  }
  func.func @transform_4(%arg0: i32) -> (i32, i32) {
    %c0_i32 = arith.constant 0 : i32
    %c0_i32_0 = arith.constant 0 : i32
    %c0_i32_1 = arith.constant 0 : i32
    return %c0_i32, %c0_i32_0 : i32, i32
  }
  func.func @transform_5(%arg0: i32) -> (i32, i32, i32) {
    %c0_i32 = arith.constant 0 : i32
    %c0_i32_0 = arith.constant 0 : i32
    %c0_i32_1 = arith.constant 0 : i32
    %c0_i32_2 = arith.constant 0 : i32
    return %c0_i32, %c0_i32_0, %c0_i32_1 : i32, i32, i32
  }
  func.func @transform_6(%arg0: i32) -> (i32, i32) {
    %c0_i32 = arith.constant 0 : i32
    %c0_i32_0 = arith.constant 0 : i32
    %c0_i32_1 = arith.constant 0 : i32
    return %c0_i32, %c0_i32_0 : i32, i32
  }
  func.func @transform_7(%arg0: i32) -> (i32, i32) {
    %c0_i32 = arith.constant 0 : i32
    %c0_i32_0 = arith.constant 0 : i32
    %c0_i32_1 = arith.constant 0 : i32
    return %c0_i32, %c0_i32_0 : i32, i32
  }
  func.func @transform_8(%arg0: i32) -> (i32, i32) {
    %c0_i32 = arith.constant 0 : i32
    %c0_i32_0 = arith.constant 0 : i32
    return %arg0, %c0_i32 : i32, i32
  }
}

module attributes {stable_mosaic.version = 11 : i64} {
  func.func @_spinal_kernel(%arg0: i32, %arg1: memref<16x16xf32, #tpu.memory_space<vmem>>, %arg2: memref<8x16xf32, #tpu.memory_space<vmem>>, %arg3: memref<1x16xf32, #tpu.memory_space<vmem>>, %arg4: memref<8x16xf32, #tpu.memory_space<vmem>>, %arg5: memref<1x16xf32, #tpu.memory_space<vmem>>, %arg6: memref<7x4x4xf32, #tpu.memory_space<vmem>>, %arg7: memref<32x16xf32, #tpu.memory_space<vmem>>, %arg8: memref<1x16xf32, #tpu.memory_space<vmem>>, %arg9: memref<16x16xf32, #tpu.memory_space<vmem>>, %arg10: memref<16x32xf32, #tpu.memory_space<vmem>>) attributes {dimension_semantics = [#tpu.dimension_semantics<parallel>], iteration_bounds = array<i64: 1>, scalar_prefetch = 0 : i64, scratch_operands = 1 : i64, tpu.core_type = #tpu.core_type<tc>, window_params = [{transform_indices = @transform_0, window_bounds = array<i64: 16, 16>}, {pipeline_mode = #tpu.pipeline_mode<synchronous>, transform_indices = @transform_1, window_bounds = array<i64: 8, 16>}, {pipeline_mode = #tpu.pipeline_mode<synchronous>, transform_indices = @transform_2, window_bounds = array<i64: 1, 16>}, {pipeline_mode = #tpu.pipeline_mode<synchronous>, transform_indices = @transform_3, window_bounds = array<i64: 8, 16>}, {pipeline_mode = #tpu.pipeline_mode<synchronous>, transform_indices = @transform_4, window_bounds = array<i64: 1, 16>}, {pipeline_mode = #tpu.pipeline_mode<synchronous>, transform_indices = @transform_5, window_bounds = array<i64: 7, 4, 4>}, {pipeline_mode = #tpu.pipeline_mode<synchronous>, transform_indices = @transform_6, window_bounds = array<i64: 32, 16>}, {pipeline_mode = #tpu.pipeline_mode<synchronous>, transform_indices = @transform_7, window_bounds = array<i64: 1, 16>}, {transform_indices = @transform_8, window_bounds = array<i64: 16, 16>}]} {
    %c0 = arith.constant 0 : index
    %c0_0 = arith.constant 0 : index
    %0 = vector.load %arg1[%c0, %c0_0] : memref<16x16xf32, #tpu.memory_space<vmem>>, vector<16x16xf32>
    %1 = vector.extract_strided_slice %0 {offsets = [0, 0], sizes = [16, 8], strides = [1, 1]} : vector<16x16xf32> to vector<16x8xf32>
    %2 = vector.extract_strided_slice %0 {offsets = [0, 8], sizes = [16, 8], strides = [1, 1]} : vector<16x16xf32> to vector<16x8xf32>
    %c0_1 = arith.constant 0 : index
    %c0_2 = arith.constant 0 : index
    %3 = vector.load %arg2[%c0_1, %c0_2] : memref<8x16xf32, #tpu.memory_space<vmem>>, vector<8x16xf32>
    %cst = arith.constant dense<0.000000e+00> : vector<16x16xf32>
    %4 = tpu.matmul %1, %3, %cst {dimension_numbers = #tpu.dot_dimension_numbers<[1], [0], [0], [1], [0, 0, 1, 1], [], []>} : vector<16x8xf32>, vector<8x16xf32>, vector<16x16xf32> -> vector<16x16xf32>
    %c0_3 = arith.constant 0 : index
    %c0_4 = arith.constant 0 : index
    %5 = vector.load %arg3[%c0_3, %c0_4] : memref<1x16xf32, #tpu.memory_space<vmem>>, vector<1x16xf32>
    %6 = vector.broadcast %5 : vector<1x16xf32> to vector<16x16xf32>
    %7 = arith.addf %4, %6 : vector<16x16xf32>
    %c0_5 = arith.constant 0 : index
    %c0_6 = arith.constant 0 : index
    %8 = vector.load %arg4[%c0_5, %c0_6] : memref<8x16xf32, #tpu.memory_space<vmem>>, vector<8x16xf32>
    %cst_7 = arith.constant dense<0.000000e+00> : vector<16x16xf32>
    %9 = tpu.matmul %2, %8, %cst_7 {dimension_numbers = #tpu.dot_dimension_numbers<[1], [0], [0], [1], [0, 0, 1, 1], [], []>} : vector<16x8xf32>, vector<8x16xf32>, vector<16x16xf32> -> vector<16x16xf32>
    %c0_8 = arith.constant 0 : index
    %c0_9 = arith.constant 0 : index
    %10 = vector.load %arg5[%c0_8, %c0_9] : memref<1x16xf32, #tpu.memory_space<vmem>>, vector<1x16xf32>
    %11 = vector.broadcast %10 : vector<1x16xf32> to vector<16x16xf32>
    %12 = arith.addf %9, %11 : vector<16x16xf32>
    %13 = vector.extract_strided_slice %7 {offsets = [0, 0], sizes = [16, 4], strides = [1, 1]} : vector<16x16xf32> to vector<16x4xf32>
    %cst_10 = arith.constant 0.000000e+00 : f32
    %14 = vector.broadcast %cst_10 : f32 to vector<16x4xf32>
    %15 = arith.maximumf %13, %14 : vector<16x4xf32>
    %c0_11 = arith.constant 0 : index
    %c0_12 = arith.constant 0 : index
    %16 = vector.load %arg10[%c0_11, %c0_12] : memref<16x32xf32, #tpu.memory_space<vmem>>, vector<16x4xf32>
    tpu.vector_store %arg10[%c0_11, %c0_12], %15 {strides = array<i32>} : memref<16x32xf32, #tpu.memory_space<vmem>>, vector<16x4xf32>,
    %17 = vector.extract_strided_slice %12 {offsets = [0, 0], sizes = [16, 4], strides = [1, 1]} : vector<16x16xf32> to vector<16x4xf32>
    %c0_13 = arith.constant 0 : index
    %c0_14 = arith.constant 0 : index
    %c0_15 = arith.constant 0 : index
    %18 = vector.load %arg6[%c0_13, %c0_14, %c0_15] : memref<7x4x4xf32, #tpu.memory_space<vmem>>, vector<1x4x4xf32>
    %19 = vector.shape_cast %18 : vector<1x4x4xf32> to vector<4x4xf32>
    %cst_16 = arith.constant dense<0.000000e+00> : vector<16x4xf32>
    %20 = tpu.matmul %15, %19, %cst_16 {dimension_numbers = #tpu.dot_dimension_numbers<[1], [0], [0], [1], [0, 0, 1, 1], [], []>} : vector<16x4xf32>, vector<4x4xf32>, vector<16x4xf32> -> vector<16x4xf32>
    %21 = arith.addf %17, %20 : vector<16x4xf32>
    %cst_17 = arith.constant 0.000000e+00 : f32
    %22 = vector.broadcast %cst_17 : f32 to vector<16x4xf32>
    %23 = arith.maximumf %21, %22 : vector<16x4xf32>
    %c0_18 = arith.constant 0 : index
    %c4 = arith.constant 4 : index
    %24 = vector.load %arg10[%c0_18, %c4] : memref<16x32xf32, #tpu.memory_space<vmem>>, vector<16x4xf32>
    tpu.vector_store %arg10[%c0_18, %c4], %23 {strides = array<i32>} : memref<16x32xf32, #tpu.memory_space<vmem>>, vector<16x4xf32>,
    %25 = vector.extract_strided_slice %7 {offsets = [0, 4], sizes = [16, 4], strides = [1, 1]} : vector<16x16xf32> to vector<16x4xf32>
    %c1 = arith.constant 1 : index
    %c0_19 = arith.constant 0 : index
    %c0_20 = arith.constant 0 : index
    %26 = vector.load %arg6[%c1, %c0_19, %c0_20] : memref<7x4x4xf32, #tpu.memory_space<vmem>>, vector<1x4x4xf32>
    %27 = vector.shape_cast %26 : vector<1x4x4xf32> to vector<4x4xf32>
    %cst_21 = arith.constant dense<0.000000e+00> : vector<16x4xf32>
    %28 = tpu.matmul %23, %27, %cst_21 {dimension_numbers = #tpu.dot_dimension_numbers<[1], [0], [0], [1], [0, 0, 1, 1], [], []>} : vector<16x4xf32>, vector<4x4xf32>, vector<16x4xf32> -> vector<16x4xf32>
    %29 = arith.addf %25, %28 : vector<16x4xf32>
    %cst_22 = arith.constant 0.000000e+00 : f32
    %30 = vector.broadcast %cst_22 : f32 to vector<16x4xf32>
    %31 = arith.maximumf %29, %30 : vector<16x4xf32>
    %c0_23 = arith.constant 0 : index
    %c8 = arith.constant 8 : index
    %32 = vector.load %arg10[%c0_23, %c8] : memref<16x32xf32, #tpu.memory_space<vmem>>, vector<16x4xf32>
    tpu.vector_store %arg10[%c0_23, %c8], %31 {strides = array<i32>} : memref<16x32xf32, #tpu.memory_space<vmem>>, vector<16x4xf32>,
    %33 = vector.extract_strided_slice %12 {offsets = [0, 4], sizes = [16, 4], strides = [1, 1]} : vector<16x16xf32> to vector<16x4xf32>
    %c2 = arith.constant 2 : index
    %c0_24 = arith.constant 0 : index
    %c0_25 = arith.constant 0 : index
    %34 = vector.load %arg6[%c2, %c0_24, %c0_25] : memref<7x4x4xf32, #tpu.memory_space<vmem>>, vector<1x4x4xf32>
    %35 = vector.shape_cast %34 : vector<1x4x4xf32> to vector<4x4xf32>
    %cst_26 = arith.constant dense<0.000000e+00> : vector<16x4xf32>
    %36 = tpu.matmul %31, %35, %cst_26 {dimension_numbers = #tpu.dot_dimension_numbers<[1], [0], [0], [1], [0, 0, 1, 1], [], []>} : vector<16x4xf32>, vector<4x4xf32>, vector<16x4xf32> -> vector<16x4xf32>
    %37 = arith.addf %33, %36 : vector<16x4xf32>
    %cst_27 = arith.constant 0.000000e+00 : f32
    %38 = vector.broadcast %cst_27 : f32 to vector<16x4xf32>
    %39 = arith.maximumf %37, %38 : vector<16x4xf32>
    %c0_28 = arith.constant 0 : index
    %c12 = arith.constant 12 : index
    %40 = vector.load %arg10[%c0_28, %c12] : memref<16x32xf32, #tpu.memory_space<vmem>>, vector<16x4xf32>
    tpu.vector_store %arg10[%c0_28, %c12], %39 {strides = array<i32>} : memref<16x32xf32, #tpu.memory_space<vmem>>, vector<16x4xf32>,
    %41 = vector.extract_strided_slice %7 {offsets = [0, 8], sizes = [16, 4], strides = [1, 1]} : vector<16x16xf32> to vector<16x4xf32>
    %c3 = arith.constant 3 : index
    %c0_29 = arith.constant 0 : index
    %c0_30 = arith.constant 0 : index
    %42 = vector.load %arg6[%c3, %c0_29, %c0_30] : memref<7x4x4xf32, #tpu.memory_space<vmem>>, vector<1x4x4xf32>
    %43 = vector.shape_cast %42 : vector<1x4x4xf32> to vector<4x4xf32>
    %cst_31 = arith.constant dense<0.000000e+00> : vector<16x4xf32>
    %44 = tpu.matmul %39, %43, %cst_31 {dimension_numbers = #tpu.dot_dimension_numbers<[1], [0], [0], [1], [0, 0, 1, 1], [], []>} : vector<16x4xf32>, vector<4x4xf32>, vector<16x4xf32> -> vector<16x4xf32>
    %45 = arith.addf %41, %44 : vector<16x4xf32>
    %cst_32 = arith.constant 0.000000e+00 : f32
    %46 = vector.broadcast %cst_32 : f32 to vector<16x4xf32>
    %47 = arith.maximumf %45, %46 : vector<16x4xf32>
    %c0_33 = arith.constant 0 : index
    %c16 = arith.constant 16 : index
    %48 = vector.load %arg10[%c0_33, %c16] : memref<16x32xf32, #tpu.memory_space<vmem>>, vector<16x4xf32>
    tpu.vector_store %arg10[%c0_33, %c16], %47 {strides = array<i32>} : memref<16x32xf32, #tpu.memory_space<vmem>>, vector<16x4xf32>,
    %49 = vector.extract_strided_slice %12 {offsets = [0, 8], sizes = [16, 4], strides = [1, 1]} : vector<16x16xf32> to vector<16x4xf32>
    %c4_34 = arith.constant 4 : index
    %c0_35 = arith.constant 0 : index
    %c0_36 = arith.constant 0 : index
    %50 = vector.load %arg6[%c4_34, %c0_35, %c0_36] : memref<7x4x4xf32, #tpu.memory_space<vmem>>, vector<1x4x4xf32>
    %51 = vector.shape_cast %50 : vector<1x4x4xf32> to vector<4x4xf32>
    %cst_37 = arith.constant dense<0.000000e+00> : vector<16x4xf32>
    %52 = tpu.matmul %47, %51, %cst_37 {dimension_numbers = #tpu.dot_dimension_numbers<[1], [0], [0], [1], [0, 0, 1, 1], [], []>} : vector<16x4xf32>, vector<4x4xf32>, vector<16x4xf32> -> vector<16x4xf32>
    %53 = arith.addf %49, %52 : vector<16x4xf32>
    %cst_38 = arith.constant 0.000000e+00 : f32
    %54 = vector.broadcast %cst_38 : f32 to vector<16x4xf32>
    %55 = arith.maximumf %53, %54 : vector<16x4xf32>
    %c0_39 = arith.constant 0 : index
    %c20 = arith.constant 20 : index
    %56 = vector.load %arg10[%c0_39, %c20] : memref<16x32xf32, #tpu.memory_space<vmem>>, vector<16x4xf32>
    tpu.vector_store %arg10[%c0_39, %c20], %55 {strides = array<i32>} : memref<16x32xf32, #tpu.memory_space<vmem>>, vector<16x4xf32>,
    %57 = vector.extract_strided_slice %7 {offsets = [0, 12], sizes = [16, 4], strides = [1, 1]} : vector<16x16xf32> to vector<16x4xf32>
    %c5 = arith.constant 5 : index
    %c0_40 = arith.constant 0 : index
    %c0_41 = arith.constant 0 : index
    %58 = vector.load %arg6[%c5, %c0_40, %c0_41] : memref<7x4x4xf32, #tpu.memory_space<vmem>>, vector<1x4x4xf32>
    %59 = vector.shape_cast %58 : vector<1x4x4xf32> to vector<4x4xf32>
    %cst_42 = arith.constant dense<0.000000e+00> : vector<16x4xf32>
    %60 = tpu.matmul %55, %59, %cst_42 {dimension_numbers = #tpu.dot_dimension_numbers<[1], [0], [0], [1], [0, 0, 1, 1], [], []>} : vector<16x4xf32>, vector<4x4xf32>, vector<16x4xf32> -> vector<16x4xf32>
    %61 = arith.addf %57, %60 : vector<16x4xf32>
    %cst_43 = arith.constant 0.000000e+00 : f32
    %62 = vector.broadcast %cst_43 : f32 to vector<16x4xf32>
    %63 = arith.maximumf %61, %62 : vector<16x4xf32>
    %c0_44 = arith.constant 0 : index
    %c24 = arith.constant 24 : index
    %64 = vector.load %arg10[%c0_44, %c24] : memref<16x32xf32, #tpu.memory_space<vmem>>, vector<16x4xf32>
    tpu.vector_store %arg10[%c0_44, %c24], %63 {strides = array<i32>} : memref<16x32xf32, #tpu.memory_space<vmem>>, vector<16x4xf32>,
    %65 = vector.extract_strided_slice %12 {offsets = [0, 12], sizes = [16, 4], strides = [1, 1]} : vector<16x16xf32> to vector<16x4xf32>
    %c6 = arith.constant 6 : index
    %c0_45 = arith.constant 0 : index
    %c0_46 = arith.constant 0 : index
    %66 = vector.load %arg6[%c6, %c0_45, %c0_46] : memref<7x4x4xf32, #tpu.memory_space<vmem>>, vector<1x4x4xf32>
    %67 = vector.shape_cast %66 : vector<1x4x4xf32> to vector<4x4xf32>
    %cst_47 = arith.constant dense<0.000000e+00> : vector<16x4xf32>
    %68 = tpu.matmul %63, %67, %cst_47 {dimension_numbers = #tpu.dot_dimension_numbers<[1], [0], [0], [1], [0, 0, 1, 1], [], []>} : vector<16x4xf32>, vector<4x4xf32>, vector<16x4xf32> -> vector<16x4xf32>
    %69 = arith.addf %65, %68 : vector<16x4xf32>
    %cst_48 = arith.constant 0.000000e+00 : f32
    %70 = vector.broadcast %cst_48 : f32 to vector<16x4xf32>
    %71 = arith.maximumf %69, %70 : vector<16x4xf32>
    %c0_49 = arith.constant 0 : index
    %c28 = arith.constant 28 : index
    %72 = vector.load %arg10[%c0_49, %c28] : memref<16x32xf32, #tpu.memory_space<vmem>>, vector<16x4xf32>
    tpu.vector_store %arg10[%c0_49, %c28], %71 {strides = array<i32>} : memref<16x32xf32, #tpu.memory_space<vmem>>, vector<16x4xf32>,
    %c0_50 = arith.constant 0 : index
    %c0_51 = arith.constant 0 : index
    %73 = vector.load %arg10[%c0_50, %c0_51] : memref<16x32xf32, #tpu.memory_space<vmem>>, vector<16x32xf32>
    %c0_52 = arith.constant 0 : index
    %c0_53 = arith.constant 0 : index
    %74 = vector.load %arg7[%c0_52, %c0_53] : memref<32x16xf32, #tpu.memory_space<vmem>>, vector<32x16xf32>
    %cst_54 = arith.constant dense<0.000000e+00> : vector<16x16xf32>
    %75 = tpu.matmul %73, %74, %cst_54 {dimension_numbers = #tpu.dot_dimension_numbers<[1], [0], [0], [1], [0, 0, 1, 1], [], []>} : vector<16x32xf32>, vector<32x16xf32>, vector<16x16xf32> -> vector<16x16xf32>
    %c0_55 = arith.constant 0 : index
    %c0_56 = arith.constant 0 : index
    %76 = vector.load %arg8[%c0_55, %c0_56] : memref<1x16xf32, #tpu.memory_space<vmem>>, vector<1x16xf32>
    %77 = vector.broadcast %76 : vector<1x16xf32> to vector<16x16xf32>
    %78 = arith.addf %75, %77 : vector<16x16xf32>
    %c0_57 = arith.constant 0 : index
    %c0_58 = arith.constant 0 : index
    %79 = vector.load %arg9[%c0_57, %c0_58] : memref<16x16xf32, #tpu.memory_space<vmem>>, vector<16x16xf32>
    tpu.vector_store %arg9[%c0_57, %c0_58], %78 {strides = array<i32>} : memref<16x16xf32, #tpu.memory_space<vmem>>, vector<16x16xf32>,
    return
  }
  func.func @transform_0(%arg0: i32) -> (i32, i32) {
    %c0_i32 = arith.constant 0 : i32
    %c0_i32_0 = arith.constant 0 : i32
    return %arg0, %c0_i32 : i32, i32
  }
  func.func @transform_1(%arg0: i32) -> (i32, i32) {
    %c0_i32 = arith.constant 0 : i32
    %c0_i32_0 = arith.constant 0 : i32
    %c0_i32_1 = arith.constant 0 : i32
    return %c0_i32, %c0_i32_0 : i32, i32
  }
  func.func @transform_2(%arg0: i32) -> (i32, i32) {
    %c0_i32 = arith.constant 0 : i32
    %c0_i32_0 = arith.constant 0 : i32
    %c0_i32_1 = arith.constant 0 : i32
    return %c0_i32, %c0_i32_0 : i32, i32
  }
  func.func @transform_3(%arg0: i32) -> (i32, i32) {
    %c0_i32 = arith.constant 0 : i32
    %c0_i32_0 = arith.constant 0 : i32
    %c0_i32_1 = arith.constant 0 : i32
    return %c0_i32, %c0_i32_0 : i32, i32
  }
  func.func @transform_4(%arg0: i32) -> (i32, i32) {
    %c0_i32 = arith.constant 0 : i32
    %c0_i32_0 = arith.constant 0 : i32
    %c0_i32_1 = arith.constant 0 : i32
    return %c0_i32, %c0_i32_0 : i32, i32
  }
  func.func @transform_5(%arg0: i32) -> (i32, i32, i32) {
    %c0_i32 = arith.constant 0 : i32
    %c0_i32_0 = arith.constant 0 : i32
    %c0_i32_1 = arith.constant 0 : i32
    %c0_i32_2 = arith.constant 0 : i32
    return %c0_i32, %c0_i32_0, %c0_i32_1 : i32, i32, i32
  }
  func.func @transform_6(%arg0: i32) -> (i32, i32) {
    %c0_i32 = arith.constant 0 : i32
    %c0_i32_0 = arith.constant 0 : i32
    %c0_i32_1 = arith.constant 0 : i32
    return %c0_i32, %c0_i32_0 : i32, i32
  }
  func.func @transform_7(%arg0: i32) -> (i32, i32) {
    %c0_i32 = arith.constant 0 : i32
    %c0_i32_0 = arith.constant 0 : i32
    %c0_i32_1 = arith.constant 0 : i32
    return %c0_i32, %c0_i32_0 : i32, i32
  }
  func.func @transform_8(%arg0: i32) -> (i32, i32) {
    %c0_i32 = arith.constant 0 : i32
    %c0_i32_0 = arith.constant 0 : i32
    return %arg0, %c0_i32 : i32, i32
  }
}

</mosaic_0001>

<llo_original>
// kernel: tpu_custom_call.1
$region0: #{tpu_custom_call.1}
  #allocation0 [shape = 'u32[]', space=smem, size = 0x4, offset = 0x4, fixed_abs, tag = 'smem constant byte address 0x4 - core index']
  #allocation1 [shape = 'u32[72,128]{1,0:T(1,128)}', space=vmem, size = 0x9000, scoped, tag = 'internal scratch']
  #allocation2 [shape = 'f32[16,32]{1,0:T(8,128)}', space=vmem, size = 0x2000, scoped, tag = 'scratch operand']
  %s0 = inlined_call_operand.vmem [shape: f32[16,16], index: 0, kind: input, shape index: {}]
  %s1 = inlined_call_operand.vmem [shape: f32[8,16], index: 1, kind: input, shape index: {}]
  %s2 = inlined_call_operand.vmem [shape: f32[1,16], index: 2, kind: input, shape index: {}]
  %s3 = inlined_call_operand.vmem [shape: f32[8,16], index: 3, kind: input, shape index: {}]
  %s4 = inlined_call_operand.vmem [shape: f32[1,16], index: 4, kind: input, shape index: {}]
  %s5 = inlined_call_operand.vmem [shape: f32[7,4,4], index: 5, kind: input, shape index: {}]
  %s6 = inlined_call_operand.vmem [shape: f32[32,16], index: 6, kind: input, shape index: {}]
  %s7 = inlined_call_operand.vmem [shape: f32[1,16], index: 7, kind: input, shape index: {}]
  %s8 = inlined_call_operand.hbm [shape: f32[16,16], index: 8, kind: output, shape index: {}]
  %s9 = sld [smem:[#allocation0]]
  $region42: #{tpu_custom_call.1} parent=0
    _
  %s11 = ssub.s32 1, %s9
  %s12 = scalar_select 0, %s11, %s9
  $region1: #{tpu_custom_call.1} parent=0
    #allocation3 [shape = 'u8[8192]{0}', space=vmem, size = 0x2000, scoped, tag = 'output window, operand 0, single buffered']
    #allocation4 [shape = 's32[1]{0}', space=sflag, size = 0x4, scoped, tag = 'scoped memory for tpu_custom_call.1']
    %13 = vsyncpa [#allocation4], 0
    // Predicated region
    $region2: #{tpu_custom_call.1} parent=1 // pred_check
      _
    $region3: #{tpu_custom_call.1} parent=1 // pred_check_branch
      %15 = sbr.rel (0) target = $region5
    $region4: #{tpu_custom_call.1} parent=1 // pred_region
      _
    $region5: #{tpu_custom_call.1} parent=1 // pred_fallthru
      _
    // Predicated region
    $region6: #{tpu_custom_call.1} parent=1 // pred_check
      _
    $region7: #{tpu_custom_call.1} parent=1 // pred_check_branch
      %17 = sbr.rel (0) target = $region9
    $region8: #{tpu_custom_call.1} parent=1 // pred_region
      _
    $region9: #{tpu_custom_call.1} parent=1 // pred_fallthru
      _
    // Predicated region
    $region10: #{tpu_custom_call.1} parent=1 // pred_check
      _
    $region11: #{tpu_custom_call.1} parent=1 // pred_check_branch
      %19 = sbr.rel (0) target = $region13
    $region12: #{tpu_custom_call.1} parent=1 // pred_region
      _
    $region13: #{tpu_custom_call.1} parent=1 // pred_fallthru
      _
    // Predicated region
    $region14: #{tpu_custom_call.1} parent=1 // pred_check
      _
    $region15: #{tpu_custom_call.1} parent=1 // pred_check_branch
      %21 = sbr.rel (0) target = $region17
    $region16: #{tpu_custom_call.1} parent=1 // pred_region
      _
    $region17: #{tpu_custom_call.1} parent=1 // pred_fallthru
      _
    // Predicated region
    $region18: #{tpu_custom_call.1} parent=1 // pred_check
      _
    $region19: #{tpu_custom_call.1} parent=1 // pred_check_branch
      %23 = sbr.rel (0) target = $region21
    $region20: #{tpu_custom_call.1} parent=1 // pred_region
      _
    $region21: #{tpu_custom_call.1} parent=1 // pred_fallthru
      _
    // Predicated region
    $region22: #{tpu_custom_call.1} parent=1 // pred_check
      _
    $region23: #{tpu_custom_call.1} parent=1 // pred_check_branch
      %25 = sbr.rel (0) target = $region25
    $region24: #{tpu_custom_call.1} parent=1 // pred_region
      _
    $region25: #{tpu_custom_call.1} parent=1 // pred_fallthru
      _
    // Predicated region
    $region26: #{tpu_custom_call.1} parent=1 // pred_check
      _
    $region27: #{tpu_custom_call.1} parent=1 // pred_check_branch
      %27 = sbr.rel (0) target = $region29
    $region28: #{tpu_custom_call.1} parent=1 // pred_region
      _
    $region29: #{tpu_custom_call.1} parent=1 // pred_fallthru
      _
    // Predicated region
    $region30: #{tpu_custom_call.1} parent=1 // pred_check
      _
    $region31: #{tpu_custom_call.1} parent=1 // pred_check_branch
      %29 = sbr.rel (0) target = $region33
    $region32: #{tpu_custom_call.1} parent=1 // pred_region
      _
    $region33: #{tpu_custom_call.1} parent=1 // pred_fallthru
      _
    %v30 = vld [vmem:[%s0] sm:$0xff]
    %v31 = vld [vmem:[%s0 + $0x8] sm:$0xff]
    %v32 = vld [vmem:[%s1] sm:$0xff]
    %v33 = vld [vmem:[%s2] sm:$0x1]
    %v35 = vperm.slane %v33, 0
    %vm37 = vcmask 64512
    %v39 = vsel %vm37, %v30, 0
    %v42 = vsel %vm37, %v31, 0
    %44 = vmatpush.msra.mxu0 0.0
    %45 = vmatpush.msra.mxu0 0.0
    %46 = vmatpush.msra.mxu0 0.0
    %47 = vmatpush.msra.mxu0 0.0
    %48 = vmatpush.msra.mxu0 0.0
    %49 = vmatpush.msra.mxu0 0.0
    %50 = vmatpush.msra.mxu0 0.0
    %51 = vmatpush.msra.mxu0 0.0
    %52 = vmatpush.msra.mxu0 0.0
    %53 = vmatpush.msra.mxu0 0.0
    %54 = vmatpush.msra.mxu0 0.0
    %55 = vmatpush.msra.mxu0 0.0
    %56 = vmatpush.msra.mxu0 0.0
    %57 = vmatpush.msra.mxu0 0.0
    %58 = vmatpush.msra.mxu0 0.0
    %59 = vmatpush.msra.mxu0 %v32
    %60 = vmatmul.f32.gmra.mxu0 %v39
    %v61 = vpop.f32.mrf.mxu0
    %v62 = vadd.f32 %v35, %v61
    %63 = vmatmul.f32.gmra.mxu0 %v42
    %v64 = vpop.f32.mrf.mxu0
    %v65 = vadd.f32 %v35, %v64
    %66 = vdwg.mxu0
    %v67 = vld [vmem:[%s3] sm:$0xff]
    %v68 = vld [vmem:[%s4] sm:$0x1]
    %v70 = vperm.slane %v68, 0
    %72 = vrot.lane.b32.xlu0 %v30, 120
    %v73 = vpop.permute.xlu0 %72
    %74 = vrot.lane.b32.xlu0 %v31, 120
    %v75 = vpop.permute.xlu0 %74
    %v76 = vsel %vm37, %v73, 0
    %v78 = vsel %vm37, %v75, 0
    %80 = vmatpush.msra.mxu0 0.0
    %81 = vmatpush.msra.mxu0 0.0
    %82 = vmatpush.msra.mxu0 0.0
    %83 = vmatpush.msra.mxu0 0.0
    %84 = vmatpush.msra.mxu0 0.0
    %85 = vmatpush.msra.mxu0 0.0
    %86 = vmatpush.msra.mxu0 0.0
    %87 = vmatpush.msra.mxu0 0.0
    %88 = vmatpush.msra.mxu0 0.0
    %89 = vmatpush.msra.mxu0 0.0
    %90 = vmatpush.msra.mxu0 0.0
    %91 = vmatpush.msra.mxu0 0.0
    %92 = vmatpush.msra.mxu0 0.0
    %93 = vmatpush.msra.mxu0 0.0
    %94 = vmatpush.msra.mxu0 0.0
    %95 = vmatpush.msra.mxu0 %v67
    %96 = vmatmul.f32.gmra.mxu0 %v76
    %v97 = vpop.f32.mrf.mxu0
    %v98 = vadd.f32 %v70, %v97
    %99 = vmatmul.f32.gmra.mxu0 %v78
    %v100 = vpop.f32.mrf.mxu0
    %v101 = vadd.f32 %v70, %v100
    %102 = vdwg.mxu0
    %v103 = vmax.f32 %v62, 0.0
    %v104 = vmax.f32 %v65, 0.0
    %vm105 = vcmask 31744
    %106 = vst.msk [vmem:[#allocation2] sm:$0xff] %vm105, %v103
    %107 = vst.msk [vmem:[#allocation2 + $0x8] sm:$0xff] %vm105, %v104
    %v108 = vld [vmem:[%s5] sm:$0xf]
    %v110 = vsel %vm105, %v103, 0
    %v113 = vsel %vm105, %v104, 0
    %vm115 = vcmask 1043456
    %v117 = vsel %vm115, %v108, 0
    %119 = vmatpush.msra.mxu0 0.0
    %120 = vmatpush.msra.mxu0 0.0
    %121 = vmatpush.msra.mxu0 0.0
    %122 = vmatpush.msra.mxu0 0.0
    %123 = vmatpush.msra.mxu0 0.0
    %124 = vmatpush.msra.mxu0 0.0
    %125 = vmatpush.msra.mxu0 0.0
    %126 = vmatpush.msra.mxu0 0.0
    %127 = vmatpush.msra.mxu0 0.0
    %128 = vmatpush.msra.mxu0 0.0
    %129 = vmatpush.msra.mxu0 0.0
    %130 = vmatpush.msra.mxu0 0.0
    %131 = vmatpush.msra.mxu0 0.0
    %132 = vmatpush.msra.mxu0 0.0
    %133 = vmatpush.msra.mxu0 0.0
    %134 = vmatpush.msra.mxu0 %v117
    %135 = vmatmul.f32.gmra.mxu0 %v110
    %v136 = vpop.f32.mrf.mxu0
    %v137 = vadd.f32 0.0, %v136
    %138 = vmatmul.f32.gmra.mxu0 %v113
    %v139 = vpop.f32.mrf.mxu0
    %v140 = vadd.f32 0.0, %v139
    %141 = vdwg.mxu0
    %v142 = vadd.f32 %v98, %v137
    %v143 = vadd.f32 %v101, %v140
    %v144 = vmax.f32 %v142, 0.0
    %v145 = vmax.f32 %v143, 0.0
    %148 = vrot.lane.b32.xlu0 %v144, 4
    %v149 = vpop.permute.xlu0 %148
    %150 = vrot.lane.b32.xlu0 %v145, 4
    %v151 = vpop.permute.xlu0 %150
    %vm154 = vcmask 64544
    %155 = vst.msk [vmem:[#allocation2] sm:$0xff] %vm154, %v149
    %156 = vst.msk [vmem:[#allocation2 + $0x8] sm:$0xff] %vm154, %v151
    %s157 = scalar_lea.vmem %s5, 4
    %v158 = vld [vmem:[%s157] sm:$0xf]
    %v159 = vsel %vm105, %v144, 0
    %v161 = vsel %vm105, %v145, 0
    %v164 = vsel %vm115, %v158, 0
    %166 = vmatpush.msra.mxu0 0.0
    %167 = vmatpush.msra.mxu0 0.0
    %168 = vmatpush.msra.mxu0 0.0
    %169 = vmatpush.msra.mxu0 0.0
    %170 = vmatpush.msra.mxu0 0.0
    %171 = vmatpush.msra.mxu0 0.0
    %172 = vmatpush.msra.mxu0 0.0
    %173 = vmatpush.msra.mxu0 0.0
    %174 = vmatpush.msra.mxu0 0.0
    %175 = vmatpush.msra.mxu0 0.0
    %176 = vmatpush.msra.mxu0 0.0
    %177 = vmatpush.msra.mxu0 0.0
    %178 = vmatpush.msra.mxu0 0.0
    %179 = vmatpush.msra.mxu0 0.0
    %180 = vmatpush.msra.mxu0 0.0
    %181 = vmatpush.msra.mxu0 %v164
    %182 = vmatmul.f32.gmra.mxu0 %v159
    %v183 = vpop.f32.mrf.mxu0
    %v184 = vadd.f32 0.0, %v183
    %185 = vmatmul.f32.gmra.mxu0 %v161
    %v186 = vpop.f32.mrf.mxu0
    %v187 = vadd.f32 0.0, %v186
    %188 = vdwg.mxu0
    %191 = vrot.lane.b32.xlu0 %v184, 4
    %v192 = vpop.permute.xlu0 %191
    %193 = vrot.lane.b32.xlu0 %v187, 4
    %v194 = vpop.permute.xlu0 %193
    %v197 = vadd.f32 %v62, %v192
    %v198 = vadd.f32 %v65, %v194
    %v199 = vmax.f32 %v197, 0.0
    %v200 = vmax.f32 %v198, 0.0
    %203 = vrot.lane.b32.xlu0 %v199, 4
    %v204 = vpop.permute.xlu0 %203
    %205 = vrot.lane.b32.xlu0 %v200, 4
    %v206 = vpop.permute.xlu0 %205
    %vm209 = vcmask 97344
    %210 = vst.msk [vmem:[#allocation2] sm:$0xff] %vm209, %v204
    %211 = vst.msk [vmem:[#allocation2 + $0x8] sm:$0xff] %vm209, %v206
    %s212 = scalar_lea.vmem %s5, 8
    %v213 = vld [vmem:[%s212] sm:$0xf]
    %214 = vrot.lane.b32.xlu0 %v199, 124
    %v215 = vpop.permute.xlu0 %214
    %216 = vrot.lane.b32.xlu0 %v200, 124
    %v217 = vpop.permute.xlu0 %216
    %v218 = vsel %vm105, %v215, 0
    %v220 = vsel %vm105, %v217, 0
    %v223 = vsel %vm115, %v213, 0
    %225 = vmatpush.msra.mxu0 0.0
    %226 = vmatpush.msra.mxu0 0.0
    %227 = vmatpush.msra.mxu0 0.0
    %228 = vmatpush.msra.mxu0 0.0
    %229 = vmatpush.msra.mxu0 0.0
    %230 = vmatpush.msra.mxu0 0.0
    %231 = vmatpush.msra.mxu0 0.0
    %232 = vmatpush.msra.mxu0 0.0
    %233 = vmatpush.msra.mxu0 0.0
    %234 = vmatpush.msra.mxu0 0.0
    %235 = vmatpush.msra.mxu0 0.0
    %236 = vmatpush.msra.mxu0 0.0
    %237 = vmatpush.msra.mxu0 0.0
    %238 = vmatpush.msra.mxu0 0.0
    %239 = vmatpush.msra.mxu0 0.0
    %240 = vmatpush.msra.mxu0 %v223
    %241 = vmatmul.f32.gmra.mxu0 %v218
    %v242 = vpop.f32.mrf.mxu0
    %v243 = vadd.f32 0.0, %v242
    %244 = vmatmul.f32.gmra.mxu0 %v220
    %v245 = vpop.f32.mrf.mxu0
    %v246 = vadd.f32 0.0, %v245
    %247 = vdwg.mxu0
    %250 = vrot.lane.b32.xlu0 %v243, 4
    %v251 = vpop.permute.xlu0 %250
    %252 = vrot.lane.b32.xlu0 %v246, 4
    %v253 = vpop.permute.xlu0 %252
    %v256 = vadd.f32 %v98, %v251
    %v257 = vadd.f32 %v101, %v253
    %v258 = vmax.f32 %v256, 0.0
    %v259 = vmax.f32 %v257, 0.0
    %262 = vrot.lane.b32.xlu0 %v258, 8
    %v263 = vpop.permute.xlu0 %262
    %264 = vrot.lane.b32.xlu0 %v259, 8
    %v265 = vpop.permute.xlu0 %264
    %vm268 = vcmask 130144
    %269 = vst.msk [vmem:[#allocation2] sm:$0xff] %vm268, %v263
    %270 = vst.msk [vmem:[#allocation2 + $0x8] sm:$0xff] %vm268, %v265
    %s271 = scalar_lea.vmem %s5, 12
    %v272 = vld [vmem:[%s271] sm:$0xf]
    %273 = vrot.lane.b32.xlu0 %v258, 124
    %v274 = vpop.permute.xlu0 %273
    %275 = vrot.lane.b32.xlu0 %v259, 124
    %v276 = vpop.permute.xlu0 %275
    %v277 = vsel %vm105, %v274, 0
    %v279 = vsel %vm105, %v276, 0
    %v282 = vsel %vm115, %v272, 0
    %284 = vmatpush.msra.mxu0 0.0
    %285 = vmatpush.msra.mxu0 0.0
    %286 = vmatpush.msra.mxu0 0.0
    %287 = vmatpush.msra.mxu0 0.0
    %288 = vmatpush.msra.mxu0 0.0
    %289 = vmatpush.msra.mxu0 0.0
    %290 = vmatpush.msra.mxu0 0.0
    %291 = vmatpush.msra.mxu0 0.0
    %292 = vmatpush.msra.mxu0 0.0
    %293 = vmatpush.msra.mxu0 0.0
    %294 = vmatpush.msra.mxu0 0.0
    %295 = vmatpush.msra.mxu0 0.0
    %296 = vmatpush.msra.mxu0 0.0
    %297 = vmatpush.msra.mxu0 0.0
    %298 = vmatpush.msra.mxu0 0.0
    %299 = vmatpush.msra.mxu0 %v282
    %300 = vmatmul.f32.gmra.mxu0 %v277
    %v301 = vpop.f32.mrf.mxu0
    %v302 = vadd.f32 0.0, %v301
    %303 = vmatmul.f32.gmra.mxu0 %v279
    %v304 = vpop.f32.mrf.mxu0
    %v305 = vadd.f32 0.0, %v304
    %306 = vdwg.mxu0
    %309 = vrot.lane.b32.xlu0 %v302, 8
    %v310 = vpop.permute.xlu0 %309
    %311 = vrot.lane.b32.xlu0 %v305, 8
    %v312 = vpop.permute.xlu0 %311
    %v315 = vadd.f32 %v62, %v310
    %v316 = vadd.f32 %v65, %v312
    %v317 = vmax.f32 %v315, 0.0
    %v318 = vmax.f32 %v316, 0.0
    %321 = vrot.lane.b32.xlu0 %v317, 8
    %v322 = vpop.permute.xlu0 %321
    %323 = vrot.lane.b32.xlu0 %v318, 8
    %v324 = vpop.permute.xlu0 %323
    %vm327 = vcmask 162944
    %328 = vst.msk [vmem:[#allocation2] sm:$0xff] %vm327, %v322
    %329 = vst.msk [vmem:[#allocation2 + $0x8] sm:$0xff] %vm327, %v324
    %s330 = scalar_lea.vmem %s5, 16
    %v331 = vld [vmem:[%s330] sm:$0xf]
    %332 = vrot.lane.b32.xlu0 %v317, 120
    %v333 = vpop.permute.xlu0 %332
    %334 = vrot.lane.b32.xlu0 %v318, 120
    %v335 = vpop.permute.xlu0 %334
    %v336 = vsel %vm105, %v333, 0
    %v338 = vsel %vm105, %v335, 0
    %v341 = vsel %vm115, %v331, 0
    %343 = vmatpush.msra.mxu0 0.0
    %344 = vmatpush.msra.mxu0 0.0
    %345 = vmatpush.msra.mxu0 0.0
    %346 = vmatpush.msra.mxu0 0.0
    %347 = vmatpush.msra.mxu0 0.0
    %348 = vmatpush.msra.mxu0 0.0
    %349 = vmatpush.msra.mxu0 0.0
    %350 = vmatpush.msra.mxu0 0.0
    %351 = vmatpush.msra.mxu0 0.0
    %352 = vmatpush.msra.mxu0 0.0
    %353 = vmatpush.msra.mxu0 0.0
    %354 = vmatpush.msra.mxu0 0.0
    %355 = vmatpush.msra.mxu0 0.0
    %356 = vmatpush.msra.mxu0 0.0
    %357 = vmatpush.msra.mxu0 0.0
    %358 = vmatpush.msra.mxu0 %v341
    %359 = vmatmul.f32.gmra.mxu0 %v336
    %v360 = vpop.f32.mrf.mxu0
    %v361 = vadd.f32 0.0, %v360
    %362 = vmatmul.f32.gmra.mxu0 %v338
    %v363 = vpop.f32.mrf.mxu0
    %v364 = vadd.f32 0.0, %v363
    %365 = vdwg.mxu0
    %368 = vrot.lane.b32.xlu0 %v361, 8
    %v369 = vpop.permute.xlu0 %368
    %370 = vrot.lane.b32.xlu0 %v364, 8
    %v371 = vpop.permute.xlu0 %370
    %v374 = vadd.f32 %v98, %v369
    %v375 = vadd.f32 %v101, %v371
    %v376 = vmax.f32 %v374, 0.0
    %v377 = vmax.f32 %v375, 0.0
    %380 = vrot.lane.b32.xlu0 %v376, 12
    %v381 = vpop.permute.xlu0 %380
    %382 = vrot.lane.b32.xlu0 %v377, 12
    %v383 = vpop.permute.xlu0 %382
    %vm386 = vcmask 195744
    %387 = vst.msk [vmem:[#allocation2] sm:$0xff] %vm386, %v381
    %388 = vst.msk [vmem:[#allocation2 + $0x8] sm:$0xff] %vm386, %v383
    %s389 = scalar_lea.vmem %s5, 20
    %v390 = vld [vmem:[%s389] sm:$0xf]
    %391 = vrot.lane.b32.xlu0 %v376, 120
    %v392 = vpop.permute.xlu0 %391
    %393 = vrot.lane.b32.xlu0 %v377, 120
    %v394 = vpop.permute.xlu0 %393
    %v395 = vsel %vm105, %v392, 0
    %v397 = vsel %vm105, %v394, 0
    %v400 = vsel %vm115, %v390, 0
    %402 = vmatpush.msra.mxu0 0.0
    %403 = vmatpush.msra.mxu0 0.0
    %404 = vmatpush.msra.mxu0 0.0
    %405 = vmatpush.msra.mxu0 0.0
    %406 = vmatpush.msra.mxu0 0.0
    %407 = vmatpush.msra.mxu0 0.0
    %408 = vmatpush.msra.mxu0 0.0
    %409 = vmatpush.msra.mxu0 0.0
    %410 = vmatpush.msra.mxu0 0.0
    %411 = vmatpush.msra.mxu0 0.0
    %412 = vmatpush.msra.mxu0 0.0
    %413 = vmatpush.msra.mxu0 0.0
    %414 = vmatpush.msra.mxu0 0.0
    %415 = vmatpush.msra.mxu0 0.0
    %416 = vmatpush.msra.mxu0 0.0
    %417 = vmatpush.msra.mxu0 %v400
    %418 = vmatmul.f32.gmra.mxu0 %v395
    %v419 = vpop.f32.mrf.mxu0
    %v420 = vadd.f32 0.0, %v419
    %421 = vmatmul.f32.gmra.mxu0 %v397
    %v422 = vpop.f32.mrf.mxu0
    %v423 = vadd.f32 0.0, %v422
    %424 = vdwg.mxu0
    %427 = vrot.lane.b32.xlu0 %v420, 12
    %v428 = vpop.permute.xlu0 %427
    %429 = vrot.lane.b32.xlu0 %v423, 12
    %v430 = vpop.permute.xlu0 %429
    %v433 = vadd.f32 %v62, %v428
    %v434 = vadd.f32 %v65, %v430
    %v435 = vmax.f32 %v433, 0.0
    %v436 = vmax.f32 %v434, 0.0
    %439 = vrot.lane.b32.xlu0 %v435, 12
    %v440 = vpop.permute.xlu0 %439
    %441 = vrot.lane.b32.xlu0 %v436, 12
    %v442 = vpop.permute.xlu0 %441
    %vm445 = vcmask 228544
    %446 = vst.msk [vmem:[#allocation2] sm:$0xff] %vm445, %v440
    %447 = vst.msk [vmem:[#allocation2 + $0x8] sm:$0xff] %vm445, %v442
    %s448 = scalar_lea.vmem %s5, 24
    %v449 = vld [vmem:[%s448] sm:$0xf]
    %450 = vrot.lane.b32.xlu0 %v435, 116
    %v451 = vpop.permute.xlu0 %450
    %452 = vrot.lane.b32.xlu0 %v436, 116
    %v453 = vpop.permute.xlu0 %452
    %v454 = vsel %vm105, %v451, 0
    %v456 = vsel %vm105, %v453, 0
    %v459 = vsel %vm115, %v449, 0
    %461 = vmatpush.msra.mxu0 0.0
    %462 = vmatpush.msra.mxu0 0.0
    %463 = vmatpush.msra.mxu0 0.0
    %464 = vmatpush.msra.mxu0 0.0
    %465 = vmatpush.msra.mxu0 0.0
    %466 = vmatpush.msra.mxu0 0.0
    %467 = vmatpush.msra.mxu0 0.0
    %468 = vmatpush.msra.mxu0 0.0
    %469 = vmatpush.msra.mxu0 0.0
    %470 = vmatpush.msra.mxu0 0.0
    %471 = vmatpush.msra.mxu0 0.0
    %472 = vmatpush.msra.mxu0 0.0
    %473 = vmatpush.msra.mxu0 0.0
    %474 = vmatpush.msra.mxu0 0.0
    %475 = vmatpush.msra.mxu0 0.0
    %476 = vmatpush.msra.mxu0 %v459
    %477 = vmatmul.f32.gmra.mxu0 %v454
    %v478 = vpop.f32.mrf.mxu0
    %v479 = vadd.f32 0.0, %v478
    %480 = vmatmul.f32.gmra.mxu0 %v456
    %v481 = vpop.f32.mrf.mxu0
    %v482 = vadd.f32 0.0, %v481
    %483 = vdwg.mxu0
    %486 = vrot.lane.b32.xlu0 %v479, 12
    %v487 = vpop.permute.xlu0 %486
    %488 = vrot.lane.b32.xlu0 %v482, 12
    %v489 = vpop.permute.xlu0 %488
    %v492 = vadd.f32 %v98, %v487
    %v493 = vadd.f32 %v101, %v489
    %v494 = vmax.f32 %v492, 0.0
    %v495 = vmax.f32 %v493, 0.0
    %498 = vrot.lane.b32.xlu0 %v494, 16
    %v499 = vpop.permute.xlu0 %498
    %500 = vrot.lane.b32.xlu0 %v495, 16
    %v501 = vpop.permute.xlu0 %500
    %vm504 = vcmask 261344
    %505 = vst.msk [vmem:[#allocation2] sm:$0xff] %vm504, %v499
    %506 = vst.msk [vmem:[#allocation2 + $0x8] sm:$0xff] %vm504, %v501
    %v507 = vld [vmem:[#allocation2] sm:$0xff]
    %v508 = vld [vmem:[#allocation2 + $0x8] sm:$0xff]
    %v509 = vld [vmem:[%s6] sm:$0xff]
    %v510 = vld [vmem:[%s6 + $0x8] sm:$0xff]
    %v511 = vld [vmem:[%s6 + $0x10] sm:$0xff]
    %v512 = vld [vmem:[%s6 + $0x18] sm:$0xff]
    %v513 = vld [vmem:[%s7] sm:$0x1]
    %v515 = vperm.slane %v513, 0
    %vm517 = vcmask 261120
    %v519 = vsel %vm517, %v507, 0
    %v522 = vsel %vm517, %v508, 0
    %524 = vmatpush.msra.mxu0 0.0
    %525 = vmatpush.msra.mxu0 0.0
    %526 = vmatpush.msra.mxu0 0.0
    %527 = vmatpush.msra.mxu0 0.0
    %528 = vmatpush.msra.mxu0 0.0
    %529 = vmatpush.msra.mxu0 0.0
    %530 = vmatpush.msra.mxu0 0.0
    %531 = vmatpush.msra.mxu0 0.0
    %532 = vmatpush.msra.mxu0 0.0
    %533 = vmatpush.msra.mxu0 0.0
    %534 = vmatpush.msra.mxu0 0.0
    %535 = vmatpush.msra.mxu0 0.0
    %536 = vmatpush.msra.mxu0 %v512
    %537 = vmatpush.msra.mxu0 %v511
    %538 = vmatpush.msra.mxu0 %v510
    %539 = vmatpush.msra.mxu0 %v509
    %540 = vmatmul.f32.gmra.mxu0 %v519
    %v541 = vpop.f32.mrf.mxu0
    %v542 = vadd.f32 %v515, %v541
    %543 = vmatmul.f32.gmra.mxu0 %v522
    %v544 = vpop.f32.mrf.mxu0
    %v545 = vadd.f32 %v515, %v544
    %546 = vdwg.mxu0
    %vm547 = vcmask 130048
    %548 = vst.msk [vmem:[#allocation3] sm:$0xff] %vm547, %v542
    %549 = vst.msk [vmem:[#allocation3 + $0x8] sm:$0xff] %vm547, %v545
    // Predicated region
    $region34: #{tpu_custom_call.1} parent=1 // pred_check
      _
    $region35: #{tpu_custom_call.1} parent=1 // pred_check_branch
      %551 = sbr.rel (0) target = $region37
    $region36: #{tpu_custom_call.1} parent=1 // pred_region
      %553 = vsyncadd [#allocation4], 0
      %s554 = sshll.u32 [#allocation3], 4
      %s555 = int_to_ptr.vmem [resolvable:$true] %s554
      %s556 = sshll.u32 %s8, 4
      %s557 = int_to_ptr.hbm [resolvable:$true] %s556
      %562 = dma.vmem_to_hbm [thread:$0]  %s555, 256, %s557, [#allocation4], 128, 128, 8
    $region37: #{tpu_custom_call.1} parent=1 // pred_fallthru
      _
    // Predicated region
    $region38: #{tpu_custom_call.1} parent=1 // pred_check
      _
    $region39: #{tpu_custom_call.1} parent=1 // pred_check_branch
      %564 = sbr.rel (0) target = $region41
    $region40: #{tpu_custom_call.1} parent=1 // pred_region
      %566 = dma.done [#allocation4], 256
    $region41: #{tpu_custom_call.1} parent=1 // pred_fallthru
      _
    %567 = vsyncpa [#allocation4], 1

// kernel: tpu_custom_call.1
$region0: #{tpu_custom_call.1}
  #allocation0 [shape = 'u32[]', space=smem, size = 0x4, offset = 0x4, fixed_abs, tag = 'smem constant byte address 0x4 - core index']
  #allocation1 [shape = 'u32[72,128]{1,0:T(1,128)}', space=vmem, size = 0x9000, scoped, tag = 'internal scratch']
  #allocation2 [shape = 'f32[16,32]{1,0:T(8,128)}', space=vmem, size = 0x2000, scoped, tag = 'scratch operand']
  %s0 = inlined_call_operand.vmem [shape: f32[16,16], index: 0, kind: input, shape index: {}]
  %s1 = inlined_call_operand.vmem [shape: f32[8,16], index: 1, kind: input, shape index: {}]
  %s2 = inlined_call_operand.vmem [shape: f32[1,16], index: 2, kind: input, shape index: {}]
  %s3 = inlined_call_operand.vmem [shape: f32[8,16], index: 3, kind: input, shape index: {}]
  %s4 = inlined_call_operand.vmem [shape: f32[1,16], index: 4, kind: input, shape index: {}]
  %s5 = inlined_call_operand.vmem [shape: f32[7,4,4], index: 5, kind: input, shape index: {}]
  %s6 = inlined_call_operand.vmem [shape: f32[32,16], index: 6, kind: input, shape index: {}]
  %s7 = inlined_call_operand.vmem [shape: f32[1,16], index: 7, kind: input, shape index: {}]
  %s8 = inlined_call_operand.hbm [shape: f32[16,16], index: 8, kind: output, shape index: {}]
  %s9 = sld [smem:[#allocation0]]
  $region42: #{tpu_custom_call.1} parent=0
    _
  %s11 = ssub.s32 1, %s9
  %s12 = scalar_select 0, %s11, %s9
  $region1: #{tpu_custom_call.1} parent=0
    #allocation3 [shape = 'u8[8192]{0}', space=vmem, size = 0x2000, scoped, tag = 'output window, operand 0, single buffered']
    #allocation4 [shape = 's32[1]{0}', space=sflag, size = 0x4, scoped, tag = 'scoped memory for tpu_custom_call.1']
    %13 = vsyncpa [#allocation4], 0
    // Predicated region
    $region2: #{tpu_custom_call.1} parent=1 // pred_check
      _
    $region3: #{tpu_custom_call.1} parent=1 // pred_check_branch
      %15 = sbr.rel (0) target = $region5
    $region4: #{tpu_custom_call.1} parent=1 // pred_region
      _
    $region5: #{tpu_custom_call.1} parent=1 // pred_fallthru
      _
    // Predicated region
    $region6: #{tpu_custom_call.1} parent=1 // pred_check
      _
    $region7: #{tpu_custom_call.1} parent=1 // pred_check_branch
      %17 = sbr.rel (0) target = $region9
    $region8: #{tpu_custom_call.1} parent=1 // pred_region
      _
    $region9: #{tpu_custom_call.1} parent=1 // pred_fallthru
      _
    // Predicated region
    $region10: #{tpu_custom_call.1} parent=1 // pred_check
      _
    $region11: #{tpu_custom_call.1} parent=1 // pred_check_branch
      %19 = sbr.rel (0) target = $region13
    $region12: #{tpu_custom_call.1} parent=1 // pred_region
      _
    $region13: #{tpu_custom_call.1} parent=1 // pred_fallthru
      _
    // Predicated region
    $region14: #{tpu_custom_call.1} parent=1 // pred_check
      _
    $region15: #{tpu_custom_call.1} parent=1 // pred_check_branch
      %21 = sbr.rel (0) target = $region17
    $region16: #{tpu_custom_call.1} parent=1 // pred_region
      _
    $region17: #{tpu_custom_call.1} parent=1 // pred_fallthru
      _
    // Predicated region
    $region18: #{tpu_custom_call.1} parent=1 // pred_check
      _
    $region19: #{tpu_custom_call.1} parent=1 // pred_check_branch
      %23 = sbr.rel (0) target = $region21
    $region20: #{tpu_custom_call.1} parent=1 // pred_region
      _
    $region21: #{tpu_custom_call.1} parent=1 // pred_fallthru
      _
    // Predicated region
    $region22: #{tpu_custom_call.1} parent=1 // pred_check
      _
    $region23: #{tpu_custom_call.1} parent=1 // pred_check_branch
      %25 = sbr.rel (0) target = $region25
    $region24: #{tpu_custom_call.1} parent=1 // pred_region
      _
    $region25: #{tpu_custom_call.1} parent=1 // pred_fallthru
      _
    // Predicated region
    $region26: #{tpu_custom_call.1} parent=1 // pred_check
      _
    $region27: #{tpu_custom_call.1} parent=1 // pred_check_branch
      %27 = sbr.rel (0) target = $region29
    $region28: #{tpu_custom_call.1} parent=1 // pred_region
      _
    $region29: #{tpu_custom_call.1} parent=1 // pred_fallthru
      _
    // Predicated region
    $region30: #{tpu_custom_call.1} parent=1 // pred_check
      _
    $region31: #{tpu_custom_call.1} parent=1 // pred_check_branch
      %29 = sbr.rel (0) target = $region33
    $region32: #{tpu_custom_call.1} parent=1 // pred_region
      _
    $region33: #{tpu_custom_call.1} parent=1 // pred_fallthru
      _
    %v30 = vld [vmem:[%s0] sm:$0xff]
    %v31 = vld [vmem:[%s0 + $0x8] sm:$0xff]
    %v32 = vld [vmem:[%s1] sm:$0xff]
    %v33 = vld [vmem:[%s2] sm:$0x1]
    %v35 = vperm.slane %v33, 0
    %vm37 = vcmask 64512
    %v39 = vsel %vm37, %v30, 0
    %v42 = vsel %vm37, %v31, 0
    %44 = vmatpush.msra.mxu0 0.0
    %45 = vmatpush.msra.mxu0 0.0
    %46 = vmatpush.msra.mxu0 0.0
    %47 = vmatpush.msra.mxu0 0.0
    %48 = vmatpush.msra.mxu0 0.0
    %49 = vmatpush.msra.mxu0 0.0
    %50 = vmatpush.msra.mxu0 0.0
    %51 = vmatpush.msra.mxu0 0.0
    %52 = vmatpush.msra.mxu0 0.0
    %53 = vmatpush.msra.mxu0 0.0
    %54 = vmatpush.msra.mxu0 0.0
    %55 = vmatpush.msra.mxu0 0.0
    %56 = vmatpush.msra.mxu0 0.0
    %57 = vmatpush.msra.mxu0 0.0
    %58 = vmatpush.msra.mxu0 0.0
    %59 = vmatpush.msra.mxu0 %v32
    %60 = vmatmul.f32.gmra.mxu0 %v39
    %v61 = vpop.f32.mrf.mxu0
    %v62 = vadd.f32 %v35, %v61
    %63 = vmatmul.f32.gmra.mxu0 %v42
    %v64 = vpop.f32.mrf.mxu0
    %v65 = vadd.f32 %v35, %v64
    %66 = vdwg.mxu0
    %v67 = vld [vmem:[%s3] sm:$0xff]
    %v68 = vld [vmem:[%s4] sm:$0x1]
    %v70 = vperm.slane %v68, 0
    %72 = vrot.lane.b32.xlu0 %v30, 120
    %v73 = vpop.permute.xlu0 %72
    %74 = vrot.lane.b32.xlu0 %v31, 120
    %v75 = vpop.permute.xlu0 %74
    %v76 = vsel %vm37, %v73, 0
    %v78 = vsel %vm37, %v75, 0
    %80 = vmatpush.msra.mxu0 0.0
    %81 = vmatpush.msra.mxu0 0.0
    %82 = vmatpush.msra.mxu0 0.0
    %83 = vmatpush.msra.mxu0 0.0
    %84 = vmatpush.msra.mxu0 0.0
    %85 = vmatpush.msra.mxu0 0.0
    %86 = vmatpush.msra.mxu0 0.0
    %87 = vmatpush.msra.mxu0 0.0
    %88 = vmatpush.msra.mxu0 0.0
    %89 = vmatpush.msra.mxu0 0.0
    %90 = vmatpush.msra.mxu0 0.0
    %91 = vmatpush.msra.mxu0 0.0
    %92 = vmatpush.msra.mxu0 0.0
    %93 = vmatpush.msra.mxu0 0.0
    %94 = vmatpush.msra.mxu0 0.0
    %95 = vmatpush.msra.mxu0 %v67
    %96 = vmatmul.f32.gmra.mxu0 %v76
    %v97 = vpop.f32.mrf.mxu0
    %v98 = vadd.f32 %v70, %v97
    %99 = vmatmul.f32.gmra.mxu0 %v78
    %v100 = vpop.f32.mrf.mxu0
    %v101 = vadd.f32 %v70, %v100
    %102 = vdwg.mxu0
    %v103 = vmax.f32 %v62, 0.0
    %v104 = vmax.f32 %v65, 0.0
    %vm105 = vcmask 31744
    %106 = vst.msk [vmem:[#allocation2] sm:$0xff] %vm105, %v103
    %107 = vst.msk [vmem:[#allocation2 + $0x8] sm:$0xff] %vm105, %v104
    %v108 = vld [vmem:[%s5] sm:$0xf]
    %v110 = vsel %vm105, %v103, 0
    %v113 = vsel %vm105, %v104, 0
    %vm115 = vcmask 1043456
    %v117 = vsel %vm115, %v108, 0
    %119 = vmatpush.msra.mxu0 0.0
    %120 = vmatpush.msra.mxu0 0.0
    %121 = vmatpush.msra.mxu0 0.0
    %122 = vmatpush.msra.mxu0 0.0
    %123 = vmatpush.msra.mxu0 0.0
    %124 = vmatpush.msra.mxu0 0.0
    %125 = vmatpush.msra.mxu0 0.0
    %126 = vmatpush.msra.mxu0 0.0
    %127 = vmatpush.msra.mxu0 0.0
    %128 = vmatpush.msra.mxu0 0.0
    %129 = vmatpush.msra.mxu0 0.0
    %130 = vmatpush.msra.mxu0 0.0
    %131 = vmatpush.msra.mxu0 0.0
    %132 = vmatpush.msra.mxu0 0.0
    %133 = vmatpush.msra.mxu0 0.0
    %134 = vmatpush.msra.mxu0 %v117
    %135 = vmatmul.f32.gmra.mxu0 %v110
    %v136 = vpop.f32.mrf.mxu0
    %v137 = vadd.f32 0.0, %v136
    %138 = vmatmul.f32.gmra.mxu0 %v113
    %v139 = vpop.f32.mrf.mxu0
    %v140 = vadd.f32 0.0, %v139
    %141 = vdwg.mxu0
    %v142 = vadd.f32 %v98, %v137
    %v143 = vadd.f32 %v101, %v140
    %v144 = vmax.f32 %v142, 0.0
    %v145 = vmax.f32 %v143, 0.0
    %148 = vrot.lane.b32.xlu0 %v144, 4
    %v149 = vpop.permute.xlu0 %148
    %150 = vrot.lane.b32.xlu0 %v145, 4
    %v151 = vpop.permute.xlu0 %150
    %vm154 = vcmask 64544
    %155 = vst.msk [vmem:[#allocation2] sm:$0xff] %vm154, %v149
    %156 = vst.msk [vmem:[#allocation2 + $0x8] sm:$0xff] %vm154, %v151
    %s157 = scalar_lea.vmem %s5, 4
    %v158 = vld [vmem:[%s157] sm:$0xf]
    %v159 = vsel %vm105, %v144, 0
    %v161 = vsel %vm105, %v145, 0
    %v164 = vsel %vm115, %v158, 0
    %166 = vmatpush.msra.mxu0 0.0
    %167 = vmatpush.msra.mxu0 0.0
    %168 = vmatpush.msra.mxu0 0.0
    %169 = vmatpush.msra.mxu0 0.0
    %170 = vmatpush.msra.mxu0 0.0
    %171 = vmatpush.msra.mxu0 0.0
    %172 = vmatpush.msra.mxu0 0.0
    %173 = vmatpush.msra.mxu0 0.0
    %174 = vmatpush.msra.mxu0 0.0
    %175 = vmatpush.msra.mxu0 0.0
    %176 = vmatpush.msra.mxu0 0.0
    %177 = vmatpush.msra.mxu0 0.0
    %178 = vmatpush.msra.mxu0 0.0
    %179 = vmatpush.msra.mxu0 0.0
    %180 = vmatpush.msra.mxu0 0.0
    %181 = vmatpush.msra.mxu0 %v164
    %182 = vmatmul.f32.gmra.mxu0 %v159
    %v183 = vpop.f32.mrf.mxu0
    %v184 = vadd.f32 0.0, %v183
    %185 = vmatmul.f32.gmra.mxu0 %v161
    %v186 = vpop.f32.mrf.mxu0
    %v187 = vadd.f32 0.0, %v186
    %188 = vdwg.mxu0
    %191 = vrot.lane.b32.xlu0 %v184, 4
    %v192 = vpop.permute.xlu0 %191
    %193 = vrot.lane.b32.xlu0 %v187, 4
    %v194 = vpop.permute.xlu0 %193
    %v197 = vadd.f32 %v62, %v192
    %v198 = vadd.f32 %v65, %v194
    %v199 = vmax.f32 %v197, 0.0
    %v200 = vmax.f32 %v198, 0.0
    %203 = vrot.lane.b32.xlu0 %v199, 4
    %v204 = vpop.permute.xlu0 %203
    %205 = vrot.lane.b32.xlu0 %v200, 4
    %v206 = vpop.permute.xlu0 %205
    %vm209 = vcmask 97344
    %210 = vst.msk [vmem:[#allocation2] sm:$0xff] %vm209, %v204
    %211 = vst.msk [vmem:[#allocation2 + $0x8] sm:$0xff] %vm209, %v206
    %s212 = scalar_lea.vmem %s5, 8
    %v213 = vld [vmem:[%s212] sm:$0xf]
    %214 = vrot.lane.b32.xlu0 %v199, 124
    %v215 = vpop.permute.xlu0 %214
    %216 = vrot.lane.b32.xlu0 %v200, 124
    %v217 = vpop.permute.xlu0 %216
    %v218 = vsel %vm105, %v215, 0
    %v220 = vsel %vm105, %v217, 0
    %v223 = vsel %vm115, %v213, 0
    %225 = vmatpush.msra.mxu0 0.0
    %226 = vmatpush.msra.mxu0 0.0
    %227 = vmatpush.msra.mxu0 0.0
    %228 = vmatpush.msra.mxu0 0.0
    %229 = vmatpush.msra.mxu0 0.0
    %230 = vmatpush.msra.mxu0 0.0
    %231 = vmatpush.msra.mxu0 0.0
    %232 = vmatpush.msra.mxu0 0.0
    %233 = vmatpush.msra.mxu0 0.0
    %234 = vmatpush.msra.mxu0 0.0
    %235 = vmatpush.msra.mxu0 0.0
    %236 = vmatpush.msra.mxu0 0.0
    %237 = vmatpush.msra.mxu0 0.0
    %238 = vmatpush.msra.mxu0 0.0
    %239 = vmatpush.msra.mxu0 0.0
    %240 = vmatpush.msra.mxu0 %v223
    %241 = vmatmul.f32.gmra.mxu0 %v218
    %v242 = vpop.f32.mrf.mxu0
    %v243 = vadd.f32 0.0, %v242
    %244 = vmatmul.f32.gmra.mxu0 %v220
    %v245 = vpop.f32.mrf.mxu0
    %v246 = vadd.f32 0.0, %v245
    %247 = vdwg.mxu0
    %250 = vrot.lane.b32.xlu0 %v243, 4
    %v251 = vpop.permute.xlu0 %250
    %252 = vrot.lane.b32.xlu0 %v246, 4
    %v253 = vpop.permute.xlu0 %252
    %v256 = vadd.f32 %v98, %v251
    %v257 = vadd.f32 %v101, %v253
    %v258 = vmax.f32 %v256, 0.0
    %v259 = vmax.f32 %v257, 0.0
    %262 = vrot.lane.b32.xlu0 %v258, 8
    %v263 = vpop.permute.xlu0 %262
    %264 = vrot.lane.b32.xlu0 %v259, 8
    %v265 = vpop.permute.xlu0 %264
    %vm268 = vcmask 130144
    %269 = vst.msk [vmem:[#allocation2] sm:$0xff] %vm268, %v263
    %270 = vst.msk [vmem:[#allocation2 + $0x8] sm:$0xff] %vm268, %v265
    %s271 = scalar_lea.vmem %s5, 12
    %v272 = vld [vmem:[%s271] sm:$0xf]
    %273 = vrot.lane.b32.xlu0 %v258, 124
    %v274 = vpop.permute.xlu0 %273
    %275 = vrot.lane.b32.xlu0 %v259, 124
    %v276 = vpop.permute.xlu0 %275
    %v277 = vsel %vm105, %v274, 0
    %v279 = vsel %vm105, %v276, 0
    %v282 = vsel %vm115, %v272, 0
    %284 = vmatpush.msra.mxu0 0.0
    %285 = vmatpush.msra.mxu0 0.0
    %286 = vmatpush.msra.mxu0 0.0
    %287 = vmatpush.msra.mxu0 0.0
    %288 = vmatpush.msra.mxu0 0.0
    %289 = vmatpush.msra.mxu0 0.0
    %290 = vmatpush.msra.mxu0 0.0
    %291 = vmatpush.msra.mxu0 0.0
    %292 = vmatpush.msra.mxu0 0.0
    %293 = vmatpush.msra.mxu0 0.0
    %294 = vmatpush.msra.mxu0 0.0
    %295 = vmatpush.msra.mxu0 0.0
    %296 = vmatpush.msra.mxu0 0.0
    %297 = vmatpush.msra.mxu0 0.0
    %298 = vmatpush.msra.mxu0 0.0
    %299 = vmatpush.msra.mxu0 %v282
    %300 = vmatmul.f32.gmra.mxu0 %v277
    %v301 = vpop.f32.mrf.mxu0
    %v302 = vadd.f32 0.0, %v301
    %303 = vmatmul.f32.gmra.mxu0 %v279
    %v304 = vpop.f32.mrf.mxu0
    %v305 = vadd.f32 0.0, %v304
    %306 = vdwg.mxu0
    %309 = vrot.lane.b32.xlu0 %v302, 8
    %v310 = vpop.permute.xlu0 %309
    %311 = vrot.lane.b32.xlu0 %v305, 8
    %v312 = vpop.permute.xlu0 %311
    %v315 = vadd.f32 %v62, %v310
    %v316 = vadd.f32 %v65, %v312
    %v317 = vmax.f32 %v315, 0.0
    %v318 = vmax.f32 %v316, 0.0
    %321 = vrot.lane.b32.xlu0 %v317, 8
    %v322 = vpop.permute.xlu0 %321
    %323 = vrot.lane.b32.xlu0 %v318, 8
    %v324 = vpop.permute.xlu0 %323
    %vm327 = vcmask 162944
    %328 = vst.msk [vmem:[#allocation2] sm:$0xff] %vm327, %v322
    %329 = vst.msk [vmem:[#allocation2 + $0x8] sm:$0xff] %vm327, %v324
    %s330 = scalar_lea.vmem %s5, 16
    %v331 = vld [vmem:[%s330] sm:$0xf]
    %332 = vrot.lane.b32.xlu0 %v317, 120
    %v333 = vpop.permute.xlu0 %332
    %334 = vrot.lane.b32.xlu0 %v318, 120
    %v335 = vpop.permute.xlu0 %334
    %v336 = vsel %vm105, %v333, 0
    %v338 = vsel %vm105, %v335, 0
    %v341 = vsel %vm115, %v331, 0
    %343 = vmatpush.msra.mxu0 0.0
    %344 = vmatpush.msra.mxu0 0.0
    %345 = vmatpush.msra.mxu0 0.0
    %346 = vmatpush.msra.mxu0 0.0
    %347 = vmatpush.msra.mxu0 0.0
    %348 = vmatpush.msra.mxu0 0.0
    %349 = vmatpush.msra.mxu0 0.0
    %350 = vmatpush.msra.mxu0 0.0
    %351 = vmatpush.msra.mxu0 0.0
    %352 = vmatpush.msra.mxu0 0.0
    %353 = vmatpush.msra.mxu0 0.0
    %354 = vmatpush.msra.mxu0 0.0
    %355 = vmatpush.msra.mxu0 0.0
    %356 = vmatpush.msra.mxu0 0.0
    %357 = vmatpush.msra.mxu0 0.0
    %358 = vmatpush.msra.mxu0 %v341
    %359 = vmatmul.f32.gmra.mxu0 %v336
    %v360 = vpop.f32.mrf.mxu0
    %v361 = vadd.f32 0.0, %v360
    %362 = vmatmul.f32.gmra.mxu0 %v338
    %v363 = vpop.f32.mrf.mxu0
    %v364 = vadd.f32 0.0, %v363
    %365 = vdwg.mxu0
    %368 = vrot.lane.b32.xlu0 %v361, 8
    %v369 = vpop.permute.xlu0 %368
    %370 = vrot.lane.b32.xlu0 %v364, 8
    %v371 = vpop.permute.xlu0 %370
    %v374 = vadd.f32 %v98, %v369
    %v375 = vadd.f32 %v101, %v371
    %v376 = vmax.f32 %v374, 0.0
    %v377 = vmax.f32 %v375, 0.0
    %380 = vrot.lane.b32.xlu0 %v376, 12
    %v381 = vpop.permute.xlu0 %380
    %382 = vrot.lane.b32.xlu0 %v377, 12
    %v383 = vpop.permute.xlu0 %382
    %vm386 = vcmask 195744
    %387 = vst.msk [vmem:[#allocation2] sm:$0xff] %vm386, %v381
    %388 = vst.msk [vmem:[#allocation2 + $0x8] sm:$0xff] %vm386, %v383
    %s389 = scalar_lea.vmem %s5, 20
    %v390 = vld [vmem:[%s389] sm:$0xf]
    %391 = vrot.lane.b32.xlu0 %v376, 120
    %v392 = vpop.permute.xlu0 %391
    %393 = vrot.lane.b32.xlu0 %v377, 120
    %v394 = vpop.permute.xlu0 %393
    %v395 = vsel %vm105, %v392, 0
    %v397 = vsel %vm105, %v394, 0
    %v400 = vsel %vm115, %v390, 0
    %402 = vmatpush.msra.mxu0 0.0
    %403 = vmatpush.msra.mxu0 0.0
    %404 = vmatpush.msra.mxu0 0.0
    %405 = vmatpush.msra.mxu0 0.0
    %406 = vmatpush.msra.mxu0 0.0
    %407 = vmatpush.msra.mxu0 0.0
    %408 = vmatpush.msra.mxu0 0.0
    %409 = vmatpush.msra.mxu0 0.0
    %410 = vmatpush.msra.mxu0 0.0
    %411 = vmatpush.msra.mxu0 0.0
    %412 = vmatpush.msra.mxu0 0.0
    %413 = vmatpush.msra.mxu0 0.0
    %414 = vmatpush.msra.mxu0 0.0
    %415 = vmatpush.msra.mxu0 0.0
    %416 = vmatpush.msra.mxu0 0.0
    %417 = vmatpush.msra.mxu0 %v400
    %418 = vmatmul.f32.gmra.mxu0 %v395
    %v419 = vpop.f32.mrf.mxu0
    %v420 = vadd.f32 0.0, %v419
    %421 = vmatmul.f32.gmra.mxu0 %v397
    %v422 = vpop.f32.mrf.mxu0
    %v423 = vadd.f32 0.0, %v422
    %424 = vdwg.mxu0
    %427 = vrot.lane.b32.xlu0 %v420, 12
    %v428 = vpop.permute.xlu0 %427
    %429 = vrot.lane.b32.xlu0 %v423, 12
    %v430 = vpop.permute.xlu0 %429
    %v433 = vadd.f32 %v62, %v428
    %v434 = vadd.f32 %v65, %v430
    %v435 = vmax.f32 %v433, 0.0
    %v436 = vmax.f32 %v434, 0.0
    %439 = vrot.lane.b32.xlu0 %v435, 12
    %v440 = vpop.permute.xlu0 %439
    %441 = vrot.lane.b32.xlu0 %v436, 12
    %v442 = vpop.permute.xlu0 %441
    %vm445 = vcmask 228544
    %446 = vst.msk [vmem:[#allocation2] sm:$0xff] %vm445, %v440
    %447 = vst.msk [vmem:[#allocation2 + $0x8] sm:$0xff] %vm445, %v442
    %s448 = scalar_lea.vmem %s5, 24
    %v449 = vld [vmem:[%s448] sm:$0xf]
    %450 = vrot.lane.b32.xlu0 %v435, 116
    %v451 = vpop.permute.xlu0 %450
    %452 = vrot.lane.b32.xlu0 %v436, 116
    %v453 = vpop.permute.xlu0 %452
    %v454 = vsel %vm105, %v451, 0
    %v456 = vsel %vm105, %v453, 0
    %v459 = vsel %vm115, %v449, 0
    %461 = vmatpush.msra.mxu0 0.0
    %462 = vmatpush.msra.mxu0 0.0
    %463 = vmatpush.msra.mxu0 0.0
    %464 = vmatpush.msra.mxu0 0.0
    %465 = vmatpush.msra.mxu0 0.0
    %466 = vmatpush.msra.mxu0 0.0
    %467 = vmatpush.msra.mxu0 0.0
    %468 = vmatpush.msra.mxu0 0.0
    %469 = vmatpush.msra.mxu0 0.0
    %470 = vmatpush.msra.mxu0 0.0
    %471 = vmatpush.msra.mxu0 0.0
    %472 = vmatpush.msra.mxu0 0.0
    %473 = vmatpush.msra.mxu0 0.0
    %474 = vmatpush.msra.mxu0 0.0
    %475 = vmatpush.msra.mxu0 0.0
    %476 = vmatpush.msra.mxu0 %v459
    %477 = vmatmul.f32.gmra.mxu0 %v454
    %v478 = vpop.f32.mrf.mxu0
    %v479 = vadd.f32 0.0, %v478
    %480 = vmatmul.f32.gmra.mxu0 %v456
    %v481 = vpop.f32.mrf.mxu0
    %v482 = vadd.f32 0.0, %v481
    %483 = vdwg.mxu0
    %486 = vrot.lane.b32.xlu0 %v479, 12
    %v487 = vpop.permute.xlu0 %486
    %488 = vrot.lane.b32.xlu0 %v482, 12
    %v489 = vpop.permute.xlu0 %488
    %v492 = vadd.f32 %v98, %v487
    %v493 = vadd.f32 %v101, %v489
    %v494 = vmax.f32 %v492, 0.0
    %v495 = vmax.f32 %v493, 0.0
    %498 = vrot.lane.b32.xlu0 %v494, 16
    %v499 = vpop.permute.xlu0 %498
    %500 = vrot.lane.b32.xlu0 %v495, 16
    %v501 = vpop.permute.xlu0 %500
    %vm504 = vcmask 261344
    %505 = vst.msk [vmem:[#allocation2] sm:$0xff] %vm504, %v499
    %506 = vst.msk [vmem:[#allocation2 + $0x8] sm:$0xff] %vm504, %v501
    %v507 = vld [vmem:[#allocation2] sm:$0xff]
    %v508 = vld [vmem:[#allocation2 + $0x8] sm:$0xff]
    %v509 = vld [vmem:[%s6] sm:$0xff]
    %v510 = vld [vmem:[%s6 + $0x8] sm:$0xff]
    %v511 = vld [vmem:[%s6 + $0x10] sm:$0xff]
    %v512 = vld [vmem:[%s6 + $0x18] sm:$0xff]
    %v513 = vld [vmem:[%s7] sm:$0x1]
    %v515 = vperm.slane %v513, 0
    %vm517 = vcmask 261120
    %v519 = vsel %vm517, %v507, 0
    %v522 = vsel %vm517, %v508, 0
    %524 = vmatpush.msra.mxu0 0.0
    %525 = vmatpush.msra.mxu0 0.0
    %526 = vmatpush.msra.mxu0 0.0
    %527 = vmatpush.msra.mxu0 0.0
    %528 = vmatpush.msra.mxu0 0.0
    %529 = vmatpush.msra.mxu0 0.0
    %530 = vmatpush.msra.mxu0 0.0
    %531 = vmatpush.msra.mxu0 0.0
    %532 = vmatpush.msra.mxu0 0.0
    %533 = vmatpush.msra.mxu0 0.0
    %534 = vmatpush.msra.mxu0 0.0
    %535 = vmatpush.msra.mxu0 0.0
    %536 = vmatpush.msra.mxu0 %v512
    %537 = vmatpush.msra.mxu0 %v511
    %538 = vmatpush.msra.mxu0 %v510
    %539 = vmatpush.msra.mxu0 %v509
    %540 = vmatmul.f32.gmra.mxu0 %v519
    %v541 = vpop.f32.mrf.mxu0
    %v542 = vadd.f32 %v515, %v541
    %543 = vmatmul.f32.gmra.mxu0 %v522
    %v544 = vpop.f32.mrf.mxu0
    %v545 = vadd.f32 %v515, %v544
    %546 = vdwg.mxu0
    %vm547 = vcmask 130048
    %548 = vst.msk [vmem:[#allocation3] sm:$0xff] %vm547, %v542
    %549 = vst.msk [vmem:[#allocation3 + $0x8] sm:$0xff] %vm547, %v545
    // Predicated region
    $region34: #{tpu_custom_call.1} parent=1 // pred_check
      _
    $region35: #{tpu_custom_call.1} parent=1 // pred_check_branch
      %551 = sbr.rel (0) target = $region37
    $region36: #{tpu_custom_call.1} parent=1 // pred_region
      %553 = vsyncadd [#allocation4], 0
      %s554 = sshll.u32 [#allocation3], 4
      %s555 = int_to_ptr.vmem [resolvable:$true] %s554
      %s556 = sshll.u32 %s8, 4
      %s557 = int_to_ptr.hbm [resolvable:$true] %s556
      %562 = dma.vmem_to_hbm [thread:$0]  %s555, 256, %s557, [#allocation4], 128, 128, 8
    $region37: #{tpu_custom_call.1} parent=1 // pred_fallthru
      _
    // Predicated region
    $region38: #{tpu_custom_call.1} parent=1 // pred_check
      _
    $region39: #{tpu_custom_call.1} parent=1 // pred_check_branch
      %564 = sbr.rel (0) target = $region41
    $region40: #{tpu_custom_call.1} parent=1 // pred_region
      %566 = dma.done [#allocation4], 256
    $region41: #{tpu_custom_call.1} parent=1 // pred_fallthru
      _
    %567 = vsyncpa [#allocation4], 1

</llo_original>
